<compile_context>
chip_gen: v7x
topology: tpu7x:2x2x1
jax: 0.10.0
libtpu: 0.0.40
codegen_flags: <defaults>
</compile_context>

<pallas_src>
import jax
import jax.numpy as jnp
from jax.experimental import pallas as pl
from jax.experimental.pallas import tpu as pltpu

# ---------------- model config (small, consistent with the module) ----------
DIM = 32                      # embed dim C
NUM_HEADS = 4                 # heads (head_dim = 8)
HEAD_DIM = DIM // NUM_HEADS
SCALE = HEAD_DIM ** (-0.5)    # qk_scale default


# ---------------- kernel -----------------------------------------------------
def attention_kernel(x_ref, wqkv_ref, wp_ref, bp_ref, o_ref, attn_ref):
    bt, n, c = x_ref.shape                      # (batch tile, tokens, C)
    h = NUM_HEADS
    d = c // h
    r = bt * n                                  # rows processed this step

    # (Bt, N, C) -> (R, C); row-major throughout, f32 everywhere.
    x2 = x_ref[...].reshape(r, c)

    # Fused QKV projection, no transpose: contract x2's feature axis against
    # the torch-layout (out, in) weight's "in" axis.  The softmax scale is
    # already folded into the q rows of wqkv (wrapper side).
    qkv = jax.lax.dot_general(
        x2, wqkv_ref[...],
        dimension_numbers=(((1,), (1,)), ((), ())),
        preferred_element_type=jnp.float32)     # (R, 3C)

    q = qkv[:, 0 * c:1 * c]                     # (R, C), scale pre-applied
    k = qkv[:, 1 * c:2 * c]
    v = qkv[:, 2 * c:3 * c]

    # Head split to a real batch axis: (R, C) -> (bt*H, N, D).
    def to_heads(t):
        return jnp.swapaxes(t.reshape(bt, n, h, d), 1, 2).reshape(bt * h, n, d)

    qh = to_heads(q)
    kh = to_heads(k)
    vh = to_heads(v)

    # Scores for every (batch, head): one batched NT matmul, (bt*H, N, N).
    s = jnp.einsum("bid,bjd->bij", qh, kh,
                   preferred_element_type=jnp.float32)

    # Numerically-stable softmax with exact normalisation (attn sums to 1).
    s = s - jnp.max(s, axis=-1, keepdims=True)
    p = jnp.exp(s)
    p = p / jnp.sum(p, axis=-1, keepdims=True)

    # attn store: plain leading-axis reshape, no per-batch slicing.
    attn_ref[...] = p.reshape(bt, h, n, n)

    # Context: batched (bt*H, N, N) @ (bt*H, N, D) -> (bt*H, N, D).
    ctx = jnp.einsum("bij,bjd->bid", p, vh,
                     preferred_element_type=jnp.float32)

    # Merge heads back to row-major (R, C).
    ctx2 = jnp.swapaxes(ctx.reshape(bt, h, n, d), 1, 2).reshape(r, c)

    # Output projection directly in (R, C) order (contract C with proj "in").
    y = jax.lax.dot_general(
        ctx2, wp_ref[...],
        dimension_numbers=(((1,), (1,)), ((), ())),
        preferred_element_type=jnp.float32)     # (R, C)
    o_ref[...] = (y + bp_ref[...]).reshape(bt, n, c)


# ---------------- wrapper -----------------------------------------------------
def _pick_batch_block(B, N):
    # Target ~256 rows (= bt*N) per grid step so vreg lanes/sublanes and the
    # MXU row dimension are well filled, while keeping several independent
    # grid steps for pipelining / megacore sharding when B is large.
    target_rows = 256
    bt = max(1, min(B, target_rows // max(N, 1)))
    while B % bt != 0:          # largest divisor of B not exceeding the target
        bt -= 1
    return bt


def attention_forward(x, params, batch_block=None):
    """x: (B, N, C) float32. params: torch-layout weights. Returns (out, attn)."""
    B, N, C = x.shape
    H = NUM_HEADS
    D = HEAD_DIM
    if batch_block is None:
        batch_block = _pick_batch_block(B, N)
    assert B % batch_block == 0
    bt = batch_block
    gb = B // bt

    # f32 operands (runtime cannot execute bf16 mixed-precision dots).
    wqkv = params["qkv_w"].astype(jnp.float32)
    # Fold the softmax scale into the q rows of the qkv weight: free, and it
    # removes the per-score multiply on the largest intermediate.
    wqkv = wqkv.at[:C].multiply(jnp.float32(SCALE))
    wp = params["proj_w"].astype(jnp.float32)
    bp = params["proj_b"].astype(jnp.float32).reshape(1, C)

    flops = int(2 * B * N * C * (3 * C)          # fused qkv
                + 2 * B * H * N * N * D          # scores
                + 2 * B * H * N * N * D          # pv
                + 2 * B * N * C * C)             # proj
    transcendentals = int(B * H * N * N)
    bytes_accessed = int(4 * (B * N * C          # x in
                              + 3 * C * C + C * C + C   # weights + bias
                              + B * N * C        # out
                              + B * H * N * N))  # attn

    out, attn = pl.pallas_call(
        attention_kernel,
        out_shape=(
            jax.ShapeDtypeStruct((B, N, C), jnp.float32),
            jax.ShapeDtypeStruct((B, H, N, N), jnp.float32),
        ),
        grid=(gb,),
        in_specs=[
            pl.BlockSpec((bt, N, C), lambda i: (i, 0, 0)),
            pl.BlockSpec((3 * C, C), lambda i: (0, 0)),
            pl.BlockSpec((C, C), lambda i: (0, 0)),
            pl.BlockSpec((1, C), lambda i: (0, 0)),
        ],
        out_specs=(
            pl.BlockSpec((bt, N, C), lambda i: (i, 0, 0)),
            pl.BlockSpec((bt, H, N, N), lambda i: (i, 0, 0, 0)),
        ),
        compiler_params=pltpu.CompilerParams(
            dimension_semantics=("parallel",)),
        cost_estimate=pl.CostEstimate(
            flops=flops, transcendentals=transcendentals,
            bytes_accessed=bytes_accessed),
    )(x.astype(jnp.float32), wqkv, wp, bp)

    return out, attn


# ---------------- pure-JAX f32 reference (matches the PyTorch module) ---------
def attention_reference(x, p):
    B, N, C = x.shape
    H, D = NUM_HEADS, HEAD_DIM
    qkv = x @ p["qkv_w"].T                                    # (B, N, 3C)
    qkv = qkv.reshape(B, N, 3, H, D).transpose(2, 0, 3, 1, 4)  # (3, B, H, N, D)
    q, k, v = qkv[0], qkv[1], qkv[2]
    attn = jnp.einsum("bhqd,bhkd->bhqk", q, k) * SCALE
    attn = jax.nn.softmax(attn, axis=-1)
    y = jnp.einsum("bhqk,bhkd->bhqd", attn, v).transpose(0, 2, 1, 3)
    y = y.reshape(B, N, C) @ p["proj_w"].T + p["proj_b"]
    return y, attn


# ---------------- deterministic parameter construction ------------------------
def make_params(key):
    ks = jax.random.split(key, 3)
    rnd = lambda k, shape, s=0.02: (s * jax.random.normal(k, shape)).astype(jnp.float32)
    return {
        "qkv_w": rnd(ks[0], (3 * DIM, DIM)),   # torch (out, in); qkv_bias=False
        "proj_w": rnd(ks[1], (DIM, DIM)),      # proj.weight (out, in)
        "proj_b": rnd(ks[2], (DIM,), 0.1),     # proj.bias
    }


if __name__ == "__main__":
    key = jax.random.PRNGKey(0)
    kx, kp = jax.random.split(key)

    B, N = 2, 8
    x = jax.random.normal(kx, (B, N, DIM), dtype=jnp.float32)
    params = make_params(kp)

    ref_out, ref_attn = attention_reference(x, params)

    # Default path: whole batch in one grid step (bt = 2 here).
    out, attn = attention_forward(x, params)
    out = jax.block_until_ready(out)
    attn = jax.block_until_ready(attn)
    assert out.shape == (B, N, DIM)
    assert attn.shape == (B, NUM_HEADS, N, N)
    assert jnp.allclose(out, ref_out, rtol=1e-2, atol=1e-3), (
        float(jnp.max(jnp.abs(out - ref_out))))
    assert jnp.allclose(attn, ref_attn, rtol=1e-2, atol=1e-3), (
        float(jnp.max(jnp.abs(attn - ref_attn))))

    # Multi-step path: one batch element per grid step (grid=(2,)).
    out2, attn2 = attention_forward(x, params, batch_block=1)
    out2 = jax.block_until_ready(out2)
    attn2 = jax.block_until_ready(attn2)
    assert jnp.allclose(out2, ref_out, rtol=1e-2, atol=1e-3), (
        float(jnp.max(jnp.abs(out2 - ref_out))))
    assert jnp.allclose(attn2, ref_attn, rtol=1e-2, atol=1e-3), (
        float(jnp.max(jnp.abs(attn2 - ref_attn))))

    print("KERNEL_OK")
</pallas_src>

<mosaic_0001>
module attributes {stable_mosaic.version = 11 : i64} {
  func.func @attention_kernel(%arg0: i32, %arg1: memref<2x8x32xf32, #tpu.memory_space<vmem>>, %arg2: memref<96x32xf32, #tpu.memory_space<vmem>>, %arg3: memref<32x32xf32, #tpu.memory_space<vmem>>, %arg4: memref<1x32xf32, #tpu.memory_space<vmem>>, %arg5: memref<2x8x32xf32, #tpu.memory_space<vmem>>, %arg6: memref<2x4x8x8xf32, #tpu.memory_space<vmem>>) attributes {dimension_semantics = [#tpu.dimension_semantics<parallel>], iteration_bounds = array<i64: 1>, scalar_prefetch = 0 : i64, scratch_operands = 0 : i64, tpu.core_type = #tpu.core_type<tc>, window_params = [{transform_indices = @transform_0, window_bounds = array<i64: 2, 8, 32>}, {pipeline_mode = #tpu.pipeline_mode<synchronous>, transform_indices = @transform_1, window_bounds = array<i64: 96, 32>}, {pipeline_mode = #tpu.pipeline_mode<synchronous>, transform_indices = @transform_2, window_bounds = array<i64: 32, 32>}, {pipeline_mode = #tpu.pipeline_mode<synchronous>, transform_indices = @transform_3, window_bounds = array<i64: 1, 32>}, {transform_indices = @transform_4, window_bounds = array<i64: 2, 8, 32>}, {transform_indices = @transform_5, window_bounds = array<i64: 2, 4, 8, 8>}]} {
    %c0 = arith.constant 0 : index
    %c0_0 = arith.constant 0 : index
    %c0_1 = arith.constant 0 : index
    %0 = vector.load %arg1[%c0, %c0_0, %c0_1] : memref<2x8x32xf32, #tpu.memory_space<vmem>>, vector<2x8x32xf32>
    %1 = vector.shape_cast %0 : vector<2x8x32xf32> to vector<16x32xf32>
    %c0_2 = arith.constant 0 : index
    %c0_3 = arith.constant 0 : index
    %2 = vector.load %arg2[%c0_2, %c0_3] : memref<96x32xf32, #tpu.memory_space<vmem>>, vector<96x32xf32>
    %cst = arith.constant dense<0.000000e+00> : vector<16x96xf32>
    %3 = tpu.matmul %1, %2, %cst {dimension_numbers = #tpu.dot_dimension_numbers<[1], [1], [0], [0], [0, 0, 1, 0], [], []>} : vector<16x32xf32>, vector<96x32xf32>, vector<16x96xf32> -> vector<16x96xf32>
    %4 = vector.extract_strided_slice %3 {offsets = [0, 0], sizes = [16, 32], strides = [1, 1]} : vector<16x96xf32> to vector<16x32xf32>
    %5 = vector.extract_strided_slice %3 {offsets = [0, 32], sizes = [16, 32], strides = [1, 1]} : vector<16x96xf32> to vector<16x32xf32>
    %6 = vector.extract_strided_slice %3 {offsets = [0, 64], sizes = [16, 32], strides = [1, 1]} : vector<16x96xf32> to vector<16x32xf32>
    %7 = vector.shape_cast %4 : vector<16x32xf32> to vector<2x8x4x8xf32>
    %8 = tpu.transpose %7, [0, 2, 1, 3] : vector<2x8x4x8xf32> -> vector<2x4x8x8xf32>
    %9 = vector.shape_cast %8 : vector<2x4x8x8xf32> to vector<8x8x8xf32>
    %10 = vector.shape_cast %5 : vector<16x32xf32> to vector<2x8x4x8xf32>
    %11 = tpu.transpose %10, [0, 2, 1, 3] : vector<2x8x4x8xf32> -> vector<2x4x8x8xf32>
    %12 = vector.shape_cast %11 : vector<2x4x8x8xf32> to vector<8x8x8xf32>
    %13 = vector.shape_cast %6 : vector<16x32xf32> to vector<2x8x4x8xf32>
    %14 = tpu.transpose %13, [0, 2, 1, 3] : vector<2x8x4x8xf32> -> vector<2x4x8x8xf32>
    %15 = vector.shape_cast %14 : vector<2x4x8x8xf32> to vector<8x8x8xf32>
    "tpu.trace_start"() <{level = 10 : i32, message = "bid,bjd->bij"}> : () -> ()
    %cst_4 = arith.constant dense<0.000000e+00> : vector<8x8x8xf32>
    %16 = tpu.matmul %9, %12, %cst_4 {dimension_numbers = #tpu.dot_dimension_numbers<[2], [2], [1], [1], [0, 0, 0, 1, 1, 1], [0], [0]>} : vector<8x8x8xf32>, vector<8x8x8xf32>, vector<8x8x8xf32> -> vector<8x8x8xf32>
    "tpu.trace_stop"() : () -> ()
    %cst_5 = arith.constant dense<0xFF800000> : vector<8x8xf32>
    %17 = vector.multi_reduction <maximumf>, %16, %cst_5 [2] : vector<8x8x8xf32> to vector<8x8xf32>
    %18 = vector.shape_cast %17 : vector<8x8xf32> to vector<8x8x1xf32>
    %19 = vector.broadcast %18 : vector<8x8x1xf32> to vector<8x8x8xf32>
    %20 = arith.subf %16, %19 : vector<8x8x8xf32>
    %21 = math.exp %20 : vector<8x8x8xf32>
    %cst_6 = arith.constant dense<0.000000e+00> : vector<8x8xf32>
    %22 = vector.multi_reduction <add>, %21, %cst_6 [2] : vector<8x8x8xf32> to vector<8x8xf32>
    %23 = vector.shape_cast %22 : vector<8x8xf32> to vector<8x8x1xf32>
    %24 = vector.broadcast %23 : vector<8x8x1xf32> to vector<8x8x8xf32>
    %25 = arith.divf %21, %24 : vector<8x8x8xf32>
    %26 = vector.shape_cast %25 : vector<8x8x8xf32> to vector<2x4x8x8xf32>
    %c0_7 = arith.constant 0 : index
    %c0_8 = arith.constant 0 : index
    %c0_9 = arith.constant 0 : index
    %c0_10 = arith.constant 0 : index
    %27 = vector.load %arg6[%c0_7, %c0_8, %c0_9, %c0_10] : memref<2x4x8x8xf32, #tpu.memory_space<vmem>>, vector<2x4x8x8xf32>
    tpu.vector_store %arg6[%c0_7, %c0_8, %c0_9, %c0_10], %26 {strides = array<i32>} : memref<2x4x8x8xf32, #tpu.memory_space<vmem>>, vector<2x4x8x8xf32>,
    "tpu.trace_start"() <{level = 10 : i32, message = "bij,bjd->bid"}> : () -> ()
    %cst_11 = arith.constant dense<0.000000e+00> : vector<8x8x8xf32>
    %28 = tpu.matmul %25, %15, %cst_11 {dimension_numbers = #tpu.dot_dimension_numbers<[2], [1], [1], [2], [0, 0, 0, 1, 1, 2], [0], [0]>} : vector<8x8x8xf32>, vector<8x8x8xf32>, vector<8x8x8xf32> -> vector<8x8x8xf32>
    "tpu.trace_stop"() : () -> ()
    %29 = vector.shape_cast %28 : vector<8x8x8xf32> to vector<2x4x8x8xf32>
    %30 = tpu.transpose %29, [0, 2, 1, 3] : vector<2x4x8x8xf32> -> vector<2x8x4x8xf32>
    %31 = vector.shape_cast %30 : vector<2x8x4x8xf32> to vector<16x32xf32>
    %c0_12 = arith.constant 0 : index
    %c0_13 = arith.constant 0 : index
    %32 = vector.load %arg3[%c0_12, %c0_13] : memref<32x32xf32, #tpu.memory_space<vmem>>, vector<32x32xf32>
    %cst_14 = arith.constant dense<0.000000e+00> : vector<16x32xf32>
    %33 = tpu.matmul %31, %32, %cst_14 {dimension_numbers = #tpu.dot_dimension_numbers<[1], [1], [0], [0], [0, 0, 1, 0], [], []>} : vector<16x32xf32>, vector<32x32xf32>, vector<16x32xf32> -> vector<16x32xf32>
    %c0_15 = arith.constant 0 : index
    %c0_16 = arith.constant 0 : index
    %34 = vector.load %arg4[%c0_15, %c0_16] : memref<1x32xf32, #tpu.memory_space<vmem>>, vector<1x32xf32>
    %35 = vector.broadcast %34 : vector<1x32xf32> to vector<16x32xf32>
    %36 = arith.addf %33, %35 : vector<16x32xf32>
    %37 = vector.shape_cast %36 : vector<16x32xf32> to vector<2x8x32xf32>
    %c0_17 = arith.constant 0 : index
    %c0_18 = arith.constant 0 : index
    %c0_19 = arith.constant 0 : index
    %38 = vector.load %arg5[%c0_17, %c0_18, %c0_19] : memref<2x8x32xf32, #tpu.memory_space<vmem>>, vector<2x8x32xf32>
    tpu.vector_store %arg5[%c0_17, %c0_18, %c0_19], %37 {strides = array<i32>} : memref<2x8x32xf32, #tpu.memory_space<vmem>>, vector<2x8x32xf32>,
    return
  }
  func.func @transform_0(%arg0: i32) -> (i32, i32, i32) {
    %c0_i32 = arith.constant 0 : i32
    %c0_i32_0 = arith.constant 0 : i32
    %c0_i32_1 = arith.constant 0 : i32
    return %arg0, %c0_i32, %c0_i32_0 : i32, i32, i32
  }
  func.func @transform_1(%arg0: i32) -> (i32, i32) {
    %c0_i32 = arith.constant 0 : i32
    %c0_i32_0 = arith.constant 0 : i32
    %c0_i32_1 = arith.constant 0 : i32
    return %c0_i32, %c0_i32_0 : i32, i32
  }
  func.func @transform_2(%arg0: i32) -> (i32, i32) {
    %c0_i32 = arith.constant 0 : i32
    %c0_i32_0 = arith.constant 0 : i32
    %c0_i32_1 = arith.constant 0 : i32
    return %c0_i32, %c0_i32_0 : i32, i32
  }
  func.func @transform_3(%arg0: i32) -> (i32, i32) {
    %c0_i32 = arith.constant 0 : i32
    %c0_i32_0 = arith.constant 0 : i32
    %c0_i32_1 = arith.constant 0 : i32
    return %c0_i32, %c0_i32_0 : i32, i32
  }
  func.func @transform_4(%arg0: i32) -> (i32, i32, i32) {
    %c0_i32 = arith.constant 0 : i32
    %c0_i32_0 = arith.constant 0 : i32
    %c0_i32_1 = arith.constant 0 : i32
    return %arg0, %c0_i32, %c0_i32_0 : i32, i32, i32
  }
  func.func @transform_5(%arg0: i32) -> (i32, i32, i32, i32) {
    %c0_i32 = arith.constant 0 : i32
    %c0_i32_0 = arith.constant 0 : i32
    %c0_i32_1 = arith.constant 0 : i32
    %c0_i32_2 = arith.constant 0 : i32
    return %arg0, %c0_i32, %c0_i32_0, %c0_i32_1 : i32, i32, i32, i32
  }
}

</mosaic_0001>

<llo_original>
// kernel: tpu_custom_call.1
$region0: #{tpu_custom_call.1}
  #allocation0 [shape = 'u32[]', space=smem, size = 0x4, offset = 0x4, fixed_abs, tag = 'smem constant byte address 0x4 - core index']
  #allocation1 [shape = 'u32[144,128]{1,0:T(1,128)}', space=vmem, size = 0x12000, scoped, tag = 'internal scratch']
  %s0 = inlined_call_operand.vmem [shape: f32[2,8,32], index: 0, kind: input, shape index: {}]
  %s1 = inlined_call_operand.vmem [shape: f32[96,32], index: 1, kind: input, shape index: {}]
  %s2 = inlined_call_operand.vmem [shape: f32[32,32], index: 2, kind: input, shape index: {}]
  %s3 = inlined_call_operand.vmem [shape: f32[1,32], index: 3, kind: input, shape index: {}]
  %s4 = inlined_call_operand.hbm [shape: f32[2,8,32], index: 4, kind: output, shape index: {0}]
  %s5 = inlined_call_operand.hbm [shape: f32[2,4,8,8], index: 5, kind: output, shape index: {1}]
  %6 = xla_tuple %s4, %s5
  %s7 = sld [smem:[#allocation0]]
  $region34: #{tpu_custom_call.1} parent=0
    _
  %s9 = ssub.s32 1, %s7
  %s10 = scalar_select 0, %s9, %s7
  $region1: #{tpu_custom_call.1} parent=0
    #allocation2 [shape = 'u8[8192]{0}', space=vmem, size = 0x2000, scoped, tag = 'output window, operand 0, single buffered']
    #allocation3 [shape = 's32[1]{0}', space=sflag, size = 0x4, scoped, tag = 'scoped memory for tpu_custom_call.1']
    #allocation4 [shape = 'u8[32768]{0}', space=vmem, size = 0x8000, scoped, tag = 'output window, operand 1, single buffered']
    #allocation5 [shape = 's32[1]{0}', space=sflag, size = 0x4, scoped, tag = 'scoped memory for tpu_custom_call.1']
    %11 = vsyncpa [#allocation3], 0
    %12 = vsyncpa [#allocation5], 0
    // Predicated region
    $region2: #{tpu_custom_call.1} parent=1 // pred_check
      _
    $region3: #{tpu_custom_call.1} parent=1 // pred_check_branch
      %14 = sbr.rel (0) target = $region5
    $region4: #{tpu_custom_call.1} parent=1 // pred_region
      _
    $region5: #{tpu_custom_call.1} parent=1 // pred_fallthru
      _
    // Predicated region
    $region6: #{tpu_custom_call.1} parent=1 // pred_check
      _
    $region7: #{tpu_custom_call.1} parent=1 // pred_check_branch
      %16 = sbr.rel (0) target = $region9
    $region8: #{tpu_custom_call.1} parent=1 // pred_region
      _
    $region9: #{tpu_custom_call.1} parent=1 // pred_fallthru
      _
    // Predicated region
    $region10: #{tpu_custom_call.1} parent=1 // pred_check
      _
    $region11: #{tpu_custom_call.1} parent=1 // pred_check_branch
      %18 = sbr.rel (0) target = $region13
    $region12: #{tpu_custom_call.1} parent=1 // pred_region
      _
    $region13: #{tpu_custom_call.1} parent=1 // pred_fallthru
      _
    // Predicated region
    $region14: #{tpu_custom_call.1} parent=1 // pred_check
      _
    $region15: #{tpu_custom_call.1} parent=1 // pred_check_branch
      %20 = sbr.rel (0) target = $region17
    $region16: #{tpu_custom_call.1} parent=1 // pred_region
      _
    $region17: #{tpu_custom_call.1} parent=1 // pred_fallthru
      _
    %v21 = vld [vmem:[%s0] sm:$0xff]
    %v22 = vld [vmem:[%s0 + $0x8] sm:$0xff]
    %v23 = vld [vmem:[%s1] sm:$0xff]
    %v24 = vld [vmem:[%s1 + $0x8] sm:$0xff]
    %v25 = vld [vmem:[%s1 + $0x10] sm:$0xff]
    %v26 = vld [vmem:[%s1 + $0x18] sm:$0xff]
    %v27 = vld [vmem:[%s1 + $0x20] sm:$0xff]
    %v28 = vld [vmem:[%s1 + $0x28] sm:$0xff]
    %v29 = vld [vmem:[%s1 + $0x30] sm:$0xff]
    %v30 = vld [vmem:[%s1 + $0x38] sm:$0xff]
    %v31 = vld [vmem:[%s1 + $0x40] sm:$0xff]
    %v32 = vld [vmem:[%s1 + $0x48] sm:$0xff]
    %v33 = vld [vmem:[%s1 + $0x50] sm:$0xff]
    %v34 = vld [vmem:[%s1 + $0x58] sm:$0xff]
    %vm35 = vcmask 261120
    %v37 = vsel %vm35, %v21, 0
    %v40 = vsel %vm35, %v22, 0
    %v43 = vsel %vm35, %v23, 0
    %v46 = vsel %vm35, %v24, 0
    %v49 = vsel %vm35, %v25, 0
    %v52 = vsel %vm35, %v26, 0
    %v55 = vsel %vm35, %v27, 0
    %v58 = vsel %vm35, %v28, 0
    %v61 = vsel %vm35, %v29, 0
    %v64 = vsel %vm35, %v30, 0
    %v67 = vsel %vm35, %v31, 0
    %v70 = vsel %vm35, %v32, 0
    %v73 = vsel %vm35, %v33, 0
    %v76 = vsel %vm35, %v34, 0
    %78 = vmatprep.subr.mxu0 0.0
    %79 = vmatpush1.xpose.msra.mxu0 %v43
    %80 = vmatprep.subr.mxu0 0.0
    %81 = vmatpush1.xpose.msra.mxu0 %v46
    %82 = vmatprep.subr.mxu0 0.0
    %83 = vmatpush1.xpose.msra.mxu0 %v49
    %84 = vmatprep.subr.mxu0 0.0
    %85 = vmatpush1.xpose.msra.mxu0 %v52
    %86 = vmatprep.subr.mxu0 0.0
    %87 = vmatpush1.xpose.msra.mxu0 %v55
    %88 = vmatprep.subr.mxu0 0.0
    %89 = vmatpush1.xpose.msra.mxu0 %v58
    %90 = vmatprep.subr.mxu0 0.0
    %91 = vmatpush1.xpose.msra.mxu0 %v61
    %92 = vmatprep.subr.mxu0 0.0
    %93 = vmatpush1.xpose.msra.mxu0 %v64
    %94 = vmatprep.subr.mxu0 0.0
    %95 = vmatpush1.xpose.msra.mxu0 %v67
    %96 = vmatprep.subr.mxu0 0.0
    %97 = vmatpush1.xpose.msra.mxu0 %v70
    %98 = vmatprep.subr.mxu0 0.0
    %99 = vmatpush1.xpose.msra.mxu0 %v73
    %100 = vmatprep.subr.mxu0 0.0
    %101 = vmatpush1.xpose.msra.mxu0 %v76
    %102 = vmatprep.subr.mxu0 0.0
    %103 = vmatpush1.xpose.msra.mxu0 0.0
    %104 = vmatprep.subr.mxu0 0.0
    %105 = vmatpush1.xpose.msra.mxu0 0.0
    %106 = vmatprep.subr.mxu0 0.0
    %107 = vmatpush1.xpose.msra.mxu0 0.0
    %108 = vmatprep.subr.mxu0 0.0
    %109 = vmatpush1.xpose.msra.mxu0 0.0
    %110 = vmatprep.subr.mxu0 0.0
    %111 = vmatpush1.xpose.msra.mxu0 0.0
    %112 = vmatprep.subr.mxu0 0.0
    %113 = vmatpush1.xpose.msra.mxu0 0.0
    %114 = vmatprep.subr.mxu0 0.0
    %115 = vmatpush1.xpose.msra.mxu0 0.0
    %116 = vmatprep.subr.mxu0 0.0
    %117 = vmatpush1.xpose.msra.mxu0 0.0
    %118 = vmatprep.subr.mxu0 0.0
    %119 = vmatpush1.xpose.msra.mxu0 0.0
    %120 = vmatprep.subr.mxu0 0.0
    %121 = vmatpush1.xpose.msra.mxu0 0.0
    %122 = vmatprep.subr.mxu0 0.0
    %123 = vmatpush1.xpose.msra.mxu0 0.0
    %124 = vmatprep.subr.mxu0 0.0
    %125 = vmatpush1.xpose.msra.mxu0 0.0
    %126 = vmatprep.subr.mxu0 0.0
    %127 = vmatpush1.xpose.msra.mxu0 0.0
    %128 = vmatprep.subr.mxu0 0.0
    %129 = vmatpush1.xpose.msra.mxu0 0.0
    %130 = vmatprep.subr.mxu0 0.0
    %131 = vmatpush1.xpose.msra.mxu0 0.0
    %132 = vmatprep.subr.mxu0 0.0
    %133 = vmatpush1.xpose.msra.mxu0 0.0
    %134 = vmatprep.subr.mxu0 0.0
    %135 = vmatpush1.xpose.msra.mxu0 0.0
    %136 = vmatprep.subr.mxu0 0.0
    %137 = vmatpush1.xpose.msra.mxu0 0.0
    %138 = vmatprep.subr.mxu0 0.0
    %139 = vmatpush1.xpose.msra.mxu0 0.0
    %140 = vmatprep.subr.mxu0 0.0
    %141 = vmatpush1.xpose.msra.mxu0 0.0
    %142 = vmatprep.mubr.f32.mxu0 0.0
    %143 = vmatmul.mubr.f32.gmra.mrb[0].mxu0 %v37
    %v144 = vpop.f32.mrb[0].mxu0
    %v145 = vadd.f32 0.0, %v144
    %v146 = vpop.f32.mrb[0].mxu0
    %147 = vmatprep.mubr.f32.mxu0 0.0
    %148 = vmatmul.mubr.f32.gmra.mrb[0].mxu0 %v40
    %v149 = vpop.f32.mrb[0].mxu0
    %v150 = vadd.f32 0.0, %v149
    %v151 = vpop.f32.mrb[0].mxu0
    %152 = vdwg.mxu0
    %155 = vrot.lane.b32.xlu0 %v145, 120
    %v156 = vpop.permute.xlu0 %155
    %157 = vrot.lane.b32.xlu0 %v150, 120
    %v158 = vpop.permute.xlu0 %157
    %161 = vrot.lane.b32.xlu0 %v145, 112
    %v162 = vpop.permute.xlu0 %161
    %163 = vrot.lane.b32.xlu0 %v150, 112
    %v164 = vpop.permute.xlu0 %163
    %167 = vrot.lane.b32.xlu0 %v145, 104
    %v168 = vpop.permute.xlu0 %167
    %169 = vrot.lane.b32.xlu0 %v150, 104
    %v170 = vpop.permute.xlu0 %169
    %v173 = vcombine.low %v145, %v162
    %v174 = vcombine.high %v145, %v162
    %v176 = vunpack.c.l.s4 1983009808
    %v177 = vunpack.c.0.s8 %v176
    %v178 = vlaneseq
    %v179 = vshrl.u32 %v178, 7
    %v180 = vsub.s32 %v177, %v179
    %v181 = vrot.slane %v173, %v180
    %v183 = vunpack.c.l.s4 1983009808
    %v184 = vunpack.c.0.s8 %v183
    %v185 = vlaneseq
    %v186 = vshrl.u32 %v185, 7
    %v187 = vsub.s32 %v184, %v186
    %v188 = vrot.slane %v174, %v187
    %v189 = vcombine.low %v156, %v168
    %v190 = vcombine.high %v156, %v168
    %v192 = vunpack.c.l.s4 1983009808
    %v193 = vunpack.c.0.s8 %v192
    %v194 = vlaneseq
    %v195 = vshrl.u32 %v194, 7
    %v196 = vsub.s32 %v193, %v195
    %v197 = vrot.slane %v189, %v196
    %v199 = vunpack.c.l.s4 1983009808
    %v200 = vunpack.c.0.s8 %v199
    %v201 = vlaneseq
    %v202 = vshrl.u32 %v201, 7
    %v203 = vsub.s32 %v200, %v202
    %v204 = vrot.slane %v190, %v203
    %v205 = vcombine.low %v181, %v197
    %v206 = vcombine.high %v181, %v197
    %v208 = vunpack.c.l.s4 1934713408
    %v209 = vunpack.c.0.s8 %v208
    %v210 = vlaneseq
    %v211 = vshrl.u32 %v210, 7
    %v212 = vsub.s32 %v209, %v211
    %v213 = vrot.slane %v205, %v212
    %v215 = vunpack.c.l.s4 1934713408
    %v216 = vunpack.c.0.s8 %v215
    %v217 = vlaneseq
    %v218 = vshrl.u32 %v217, 7
    %v219 = vsub.s32 %v216, %v218
    %v220 = vrot.slane %v206, %v219
    %v221 = vcombine.low %v188, %v204
    %v222 = vcombine.high %v188, %v204
    %v224 = vunpack.c.l.s4 1934713408
    %v225 = vunpack.c.0.s8 %v224
    %v226 = vlaneseq
    %v227 = vshrl.u32 %v226, 7
    %v228 = vsub.s32 %v225, %v227
    %v229 = vrot.slane %v221, %v228
    %v231 = vunpack.c.l.s4 1934713408
    %v232 = vunpack.c.0.s8 %v231
    %v233 = vlaneseq
    %v234 = vshrl.u32 %v233, 7
    %v235 = vsub.s32 %v232, %v234
    %v236 = vrot.slane %v222, %v235
    %v237 = vcombine.high %v213, 0.0
    %v238 = vcombine.high %v220, 0.0
    %v239 = vcombine.high %v229, 0.0
    %v240 = vcombine.high %v236, 0.0
    %v241 = vcombine.low %v150, %v164
    %v242 = vcombine.high %v150, %v164
    %v244 = vunpack.c.l.s4 1983009808
    %v245 = vunpack.c.0.s8 %v244
    %v246 = vlaneseq
    %v247 = vshrl.u32 %v246, 7
    %v248 = vsub.s32 %v245, %v247
    %v249 = vrot.slane %v241, %v248
    %v251 = vunpack.c.l.s4 1983009808
    %v252 = vunpack.c.0.s8 %v251
    %v253 = vlaneseq
    %v254 = vshrl.u32 %v253, 7
    %v255 = vsub.s32 %v252, %v254
    %v256 = vrot.slane %v242, %v255
    %v257 = vcombine.low %v158, %v170
    %v258 = vcombine.high %v158, %v170
    %v260 = vunpack.c.l.s4 1983009808
    %v261 = vunpack.c.0.s8 %v260
    %v262 = vlaneseq
    %v263 = vshrl.u32 %v262, 7
    %v264 = vsub.s32 %v261, %v263
    %v265 = vrot.slane %v257, %v264
    %v267 = vunpack.c.l.s4 1983009808
    %v268 = vunpack.c.0.s8 %v267
    %v269 = vlaneseq
    %v270 = vshrl.u32 %v269, 7
    %v271 = vsub.s32 %v268, %v270
    %v272 = vrot.slane %v258, %v271
    %v273 = vcombine.low %v249, %v265
    %v274 = vcombine.high %v249, %v265
    %v276 = vunpack.c.l.s4 1934713408
    %v277 = vunpack.c.0.s8 %v276
    %v278 = vlaneseq
    %v279 = vshrl.u32 %v278, 7
    %v280 = vsub.s32 %v277, %v279
    %v281 = vrot.slane %v273, %v280
    %v283 = vunpack.c.l.s4 1934713408
    %v284 = vunpack.c.0.s8 %v283
    %v285 = vlaneseq
    %v286 = vshrl.u32 %v285, 7
    %v287 = vsub.s32 %v284, %v286
    %v288 = vrot.slane %v274, %v287
    %v289 = vcombine.low %v256, %v272
    %v290 = vcombine.high %v256, %v272
    %v292 = vunpack.c.l.s4 1934713408
    %v293 = vunpack.c.0.s8 %v292
    %v294 = vlaneseq
    %v295 = vshrl.u32 %v294, 7
    %v296 = vsub.s32 %v293, %v295
    %v297 = vrot.slane %v289, %v296
    %v299 = vunpack.c.l.s4 1934713408
    %v300 = vunpack.c.0.s8 %v299
    %v301 = vlaneseq
    %v302 = vshrl.u32 %v301, 7
    %v303 = vsub.s32 %v300, %v302
    %v304 = vrot.slane %v290, %v303
    %v305 = vcombine.high %v281, 0.0
    %v306 = vcombine.high %v288, 0.0
    %v307 = vcombine.high %v297, 0.0
    %v308 = vcombine.high %v304, 0.0
    %v309 = vcombine.low %v213, %v220
    %v311 = vunpack.c.l.s4 1983009808
    %v312 = vunpack.c.0.s8 %v311
    %v313 = vlaneseq
    %v314 = vshrl.u32 %v313, 7
    %v315 = vsub.s32 %v312, %v314
    %v316 = vrot.slane %v309, %v315
    %v317 = vcombine.low %v237, %v238
    %v319 = vunpack.c.l.s4 1983009808
    %v320 = vunpack.c.0.s8 %v319
    %v321 = vlaneseq
    %v322 = vshrl.u32 %v321, 7
    %v323 = vsub.s32 %v320, %v322
    %v324 = vrot.slane %v317, %v323
    %v325 = vcombine.low %v229, %v236
    %v327 = vunpack.c.l.s4 1983009808
    %v328 = vunpack.c.0.s8 %v327
    %v329 = vlaneseq
    %v330 = vshrl.u32 %v329, 7
    %v331 = vsub.s32 %v328, %v330
    %v332 = vrot.slane %v325, %v331
    %v333 = vcombine.low %v239, %v240
    %v335 = vunpack.c.l.s4 1983009808
    %v336 = vunpack.c.0.s8 %v335
    %v337 = vlaneseq
    %v338 = vshrl.u32 %v337, 7
    %v339 = vsub.s32 %v336, %v338
    %v340 = vrot.slane %v333, %v339
    %v341 = vcombine.low %v316, %v324
    %v342 = vcombine.high %v316, %v324
    %v344 = vunpack.c.l.s4 1934713408
    %v345 = vunpack.c.0.s8 %v344
    %v346 = vlaneseq
    %v347 = vshrl.u32 %v346, 7
    %v348 = vsub.s32 %v345, %v347
    %v349 = vrot.slane %v341, %v348
    %v351 = vunpack.c.l.s4 1934713408
    %v352 = vunpack.c.0.s8 %v351
    %v353 = vlaneseq
    %v354 = vshrl.u32 %v353, 7
    %v355 = vsub.s32 %v352, %v354
    %v356 = vrot.slane %v342, %v355
    %v357 = vcombine.low %v332, %v340
    %v358 = vcombine.high %v332, %v340
    %v360 = vunpack.c.l.s4 1934713408
    %v361 = vunpack.c.0.s8 %v360
    %v362 = vlaneseq
    %v363 = vshrl.u32 %v362, 7
    %v364 = vsub.s32 %v361, %v363
    %v365 = vrot.slane %v357, %v364
    %v367 = vunpack.c.l.s4 1934713408
    %v368 = vunpack.c.0.s8 %v367
    %v369 = vlaneseq
    %v370 = vshrl.u32 %v369, 7
    %v371 = vsub.s32 %v368, %v370
    %v372 = vrot.slane %v358, %v371
    %v373 = vcombine.low %v349, %v365
    %v374 = vcombine.high %v349, %v365
    %v375 = vcombine.low %v356, %v372
    %v376 = vcombine.high %v356, %v372
    %v377 = vcombine.low %v281, %v288
    %v379 = vunpack.c.l.s4 1983009808
    %v380 = vunpack.c.0.s8 %v379
    %v381 = vlaneseq
    %v382 = vshrl.u32 %v381, 7
    %v383 = vsub.s32 %v380, %v382
    %v384 = vrot.slane %v377, %v383
    %v385 = vcombine.low %v305, %v306
    %v387 = vunpack.c.l.s4 1983009808
    %v388 = vunpack.c.0.s8 %v387
    %v389 = vlaneseq
    %v390 = vshrl.u32 %v389, 7
    %v391 = vsub.s32 %v388, %v390
    %v392 = vrot.slane %v385, %v391
    %v393 = vcombine.low %v297, %v304
    %v395 = vunpack.c.l.s4 1983009808
    %v396 = vunpack.c.0.s8 %v395
    %v397 = vlaneseq
    %v398 = vshrl.u32 %v397, 7
    %v399 = vsub.s32 %v396, %v398
    %v400 = vrot.slane %v393, %v399
    %v401 = vcombine.low %v307, %v308
    %v403 = vunpack.c.l.s4 1983009808
    %v404 = vunpack.c.0.s8 %v403
    %v405 = vlaneseq
    %v406 = vshrl.u32 %v405, 7
    %v407 = vsub.s32 %v404, %v406
    %v408 = vrot.slane %v401, %v407
    %v409 = vcombine.low %v384, %v392
    %v410 = vcombine.high %v384, %v392
    %v412 = vunpack.c.l.s4 1934713408
    %v413 = vunpack.c.0.s8 %v412
    %v414 = vlaneseq
    %v415 = vshrl.u32 %v414, 7
    %v416 = vsub.s32 %v413, %v415
    %v417 = vrot.slane %v409, %v416
    %v419 = vunpack.c.l.s4 1934713408
    %v420 = vunpack.c.0.s8 %v419
    %v421 = vlaneseq
    %v422 = vshrl.u32 %v421, 7
    %v423 = vsub.s32 %v420, %v422
    %v424 = vrot.slane %v410, %v423
    %v425 = vcombine.low %v400, %v408
    %v426 = vcombine.high %v400, %v408
    %v428 = vunpack.c.l.s4 1934713408
    %v429 = vunpack.c.0.s8 %v428
    %v430 = vlaneseq
    %v431 = vshrl.u32 %v430, 7
    %v432 = vsub.s32 %v429, %v431
    %v433 = vrot.slane %v425, %v432
    %v435 = vunpack.c.l.s4 1934713408
    %v436 = vunpack.c.0.s8 %v435
    %v437 = vlaneseq
    %v438 = vshrl.u32 %v437, 7
    %v439 = vsub.s32 %v436, %v438
    %v440 = vrot.slane %v426, %v439
    %v441 = vcombine.low %v417, %v433
    %v442 = vcombine.high %v417, %v433
    %v443 = vcombine.low %v424, %v440
    %v444 = vcombine.high %v424, %v440
    %445 = vrot.lane.b32.xlu0 %v145, 96
    %v446 = vpop.permute.xlu0 %445
    %447 = vrot.lane.b32.xlu0 %v150, 96
    %v448 = vpop.permute.xlu0 %447
    %449 = vrot.lane.b32.xlu0 %v156, 96
    %v450 = vpop.permute.xlu0 %449
    %451 = vrot.lane.b32.xlu0 %v158, 96
    %v452 = vpop.permute.xlu0 %451
    %453 = vrot.lane.b32.xlu0 %v162, 96
    %v454 = vpop.permute.xlu0 %453
    %455 = vrot.lane.b32.xlu0 %v164, 96
    %v456 = vpop.permute.xlu0 %455
    %457 = vrot.lane.b32.xlu0 %v168, 96
    %v458 = vpop.permute.xlu0 %457
    %459 = vrot.lane.b32.xlu0 %v170, 96
    %v460 = vpop.permute.xlu0 %459
    %v469 = vcombine.low %v446, %v454
    %v470 = vcombine.high %v446, %v454
    %v472 = vunpack.c.l.s4 1983009808
    %v473 = vunpack.c.0.s8 %v472
    %v474 = vlaneseq
    %v475 = vshrl.u32 %v474, 7
    %v476 = vsub.s32 %v473, %v475
    %v477 = vrot.slane %v469, %v476
    %v479 = vunpack.c.l.s4 1983009808
    %v480 = vunpack.c.0.s8 %v479
    %v481 = vlaneseq
    %v482 = vshrl.u32 %v481, 7
    %v483 = vsub.s32 %v480, %v482
    %v484 = vrot.slane %v470, %v483
    %v485 = vcombine.low %v450, %v458
    %v486 = vcombine.high %v450, %v458
    %v488 = vunpack.c.l.s4 1983009808
    %v489 = vunpack.c.0.s8 %v488
    %v490 = vlaneseq
    %v491 = vshrl.u32 %v490, 7
    %v492 = vsub.s32 %v489, %v491
    %v493 = vrot.slane %v485, %v492
    %v495 = vunpack.c.l.s4 1983009808
    %v496 = vunpack.c.0.s8 %v495
    %v497 = vlaneseq
    %v498 = vshrl.u32 %v497, 7
    %v499 = vsub.s32 %v496, %v498
    %v500 = vrot.slane %v486, %v499
    %v501 = vcombine.low %v477, %v493
    %v502 = vcombine.high %v477, %v493
    %v504 = vunpack.c.l.s4 1934713408
    %v505 = vunpack.c.0.s8 %v504
    %v506 = vlaneseq
    %v507 = vshrl.u32 %v506, 7
    %v508 = vsub.s32 %v505, %v507
    %v509 = vrot.slane %v501, %v508
    %v511 = vunpack.c.l.s4 1934713408
    %v512 = vunpack.c.0.s8 %v511
    %v513 = vlaneseq
    %v514 = vshrl.u32 %v513, 7
    %v515 = vsub.s32 %v512, %v514
    %v516 = vrot.slane %v502, %v515
    %v517 = vcombine.low %v484, %v500
    %v518 = vcombine.high %v484, %v500
    %v520 = vunpack.c.l.s4 1934713408
    %v521 = vunpack.c.0.s8 %v520
    %v522 = vlaneseq
    %v523 = vshrl.u32 %v522, 7
    %v524 = vsub.s32 %v521, %v523
    %v525 = vrot.slane %v517, %v524
    %v527 = vunpack.c.l.s4 1934713408
    %v528 = vunpack.c.0.s8 %v527
    %v529 = vlaneseq
    %v530 = vshrl.u32 %v529, 7
    %v531 = vsub.s32 %v528, %v530
    %v532 = vrot.slane %v518, %v531
    %v533 = vcombine.high %v509, 0.0
    %v534 = vcombine.high %v516, 0.0
    %v535 = vcombine.high %v525, 0.0
    %v536 = vcombine.high %v532, 0.0
    %v537 = vcombine.low %v448, %v456
    %v538 = vcombine.high %v448, %v456
    %v540 = vunpack.c.l.s4 1983009808
    %v541 = vunpack.c.0.s8 %v540
    %v542 = vlaneseq
    %v543 = vshrl.u32 %v542, 7
    %v544 = vsub.s32 %v541, %v543
    %v545 = vrot.slane %v537, %v544
    %v547 = vunpack.c.l.s4 1983009808
    %v548 = vunpack.c.0.s8 %v547
    %v549 = vlaneseq
    %v550 = vshrl.u32 %v549, 7
    %v551 = vsub.s32 %v548, %v550
    %v552 = vrot.slane %v538, %v551
    %v553 = vcombine.low %v452, %v460
    %v554 = vcombine.high %v452, %v460
    %v556 = vunpack.c.l.s4 1983009808
    %v557 = vunpack.c.0.s8 %v556
    %v558 = vlaneseq
    %v559 = vshrl.u32 %v558, 7
    %v560 = vsub.s32 %v557, %v559
    %v561 = vrot.slane %v553, %v560
    %v563 = vunpack.c.l.s4 1983009808
    %v564 = vunpack.c.0.s8 %v563
    %v565 = vlaneseq
    %v566 = vshrl.u32 %v565, 7
    %v567 = vsub.s32 %v564, %v566
    %v568 = vrot.slane %v554, %v567
    %v569 = vcombine.low %v545, %v561
    %v570 = vcombine.high %v545, %v561
    %v572 = vunpack.c.l.s4 1934713408
    %v573 = vunpack.c.0.s8 %v572
    %v574 = vlaneseq
    %v575 = vshrl.u32 %v574, 7
    %v576 = vsub.s32 %v573, %v575
    %v577 = vrot.slane %v569, %v576
    %v579 = vunpack.c.l.s4 1934713408
    %v580 = vunpack.c.0.s8 %v579
    %v581 = vlaneseq
    %v582 = vshrl.u32 %v581, 7
    %v583 = vsub.s32 %v580, %v582
    %v584 = vrot.slane %v570, %v583
    %v585 = vcombine.low %v552, %v568
    %v586 = vcombine.high %v552, %v568
    %v588 = vunpack.c.l.s4 1934713408
    %v589 = vunpack.c.0.s8 %v588
    %v590 = vlaneseq
    %v591 = vshrl.u32 %v590, 7
    %v592 = vsub.s32 %v589, %v591
    %v593 = vrot.slane %v585, %v592
    %v595 = vunpack.c.l.s4 1934713408
    %v596 = vunpack.c.0.s8 %v595
    %v597 = vlaneseq
    %v598 = vshrl.u32 %v597, 7
    %v599 = vsub.s32 %v596, %v598
    %v600 = vrot.slane %v586, %v599
    %v601 = vcombine.high %v577, 0.0
    %v602 = vcombine.high %v584, 0.0
    %v603 = vcombine.high %v593, 0.0
    %v604 = vcombine.high %v600, 0.0
    %v605 = vcombine.low %v509, %v516
    %v607 = vunpack.c.l.s4 1983009808
    %v608 = vunpack.c.0.s8 %v607
    %v609 = vlaneseq
    %v610 = vshrl.u32 %v609, 7
    %v611 = vsub.s32 %v608, %v610
    %v612 = vrot.slane %v605, %v611
    %v613 = vcombine.low %v533, %v534
    %v615 = vunpack.c.l.s4 1983009808
    %v616 = vunpack.c.0.s8 %v615
    %v617 = vlaneseq
    %v618 = vshrl.u32 %v617, 7
    %v619 = vsub.s32 %v616, %v618
    %v620 = vrot.slane %v613, %v619
    %v621 = vcombine.low %v525, %v532
    %v623 = vunpack.c.l.s4 1983009808
    %v624 = vunpack.c.0.s8 %v623
    %v625 = vlaneseq
    %v626 = vshrl.u32 %v625, 7
    %v627 = vsub.s32 %v624, %v626
    %v628 = vrot.slane %v621, %v627
    %v629 = vcombine.low %v535, %v536
    %v631 = vunpack.c.l.s4 1983009808
    %v632 = vunpack.c.0.s8 %v631
    %v633 = vlaneseq
    %v634 = vshrl.u32 %v633, 7
    %v635 = vsub.s32 %v632, %v634
    %v636 = vrot.slane %v629, %v635
    %v637 = vcombine.low %v612, %v620
    %v638 = vcombine.high %v612, %v620
    %v640 = vunpack.c.l.s4 1934713408
    %v641 = vunpack.c.0.s8 %v640
    %v642 = vlaneseq
    %v643 = vshrl.u32 %v642, 7
    %v644 = vsub.s32 %v641, %v643
    %v645 = vrot.slane %v637, %v644
    %v647 = vunpack.c.l.s4 1934713408
    %v648 = vunpack.c.0.s8 %v647
    %v649 = vlaneseq
    %v650 = vshrl.u32 %v649, 7
    %v651 = vsub.s32 %v648, %v650
    %v652 = vrot.slane %v638, %v651
    %v653 = vcombine.low %v628, %v636
    %v654 = vcombine.high %v628, %v636
    %v656 = vunpack.c.l.s4 1934713408
    %v657 = vunpack.c.0.s8 %v656
    %v658 = vlaneseq
    %v659 = vshrl.u32 %v658, 7
    %v660 = vsub.s32 %v657, %v659
    %v661 = vrot.slane %v653, %v660
    %v663 = vunpack.c.l.s4 1934713408
    %v664 = vunpack.c.0.s8 %v663
    %v665 = vlaneseq
    %v666 = vshrl.u32 %v665, 7
    %v667 = vsub.s32 %v664, %v666
    %v668 = vrot.slane %v654, %v667
    %v669 = vcombine.low %v645, %v661
    %v670 = vcombine.high %v645, %v661
    %v671 = vcombine.low %v652, %v668
    %v672 = vcombine.high %v652, %v668
    %v673 = vcombine.low %v577, %v584
    %v675 = vunpack.c.l.s4 1983009808
    %v676 = vunpack.c.0.s8 %v675
    %v677 = vlaneseq
    %v678 = vshrl.u32 %v677, 7
    %v679 = vsub.s32 %v676, %v678
    %v680 = vrot.slane %v673, %v679
    %v681 = vcombine.low %v601, %v602
    %v683 = vunpack.c.l.s4 1983009808
    %v684 = vunpack.c.0.s8 %v683
    %v685 = vlaneseq
    %v686 = vshrl.u32 %v685, 7
    %v687 = vsub.s32 %v684, %v686
    %v688 = vrot.slane %v681, %v687
    %v689 = vcombine.low %v593, %v600
    %v691 = vunpack.c.l.s4 1983009808
    %v692 = vunpack.c.0.s8 %v691
    %v693 = vlaneseq
    %v694 = vshrl.u32 %v693, 7
    %v695 = vsub.s32 %v692, %v694
    %v696 = vrot.slane %v689, %v695
    %v697 = vcombine.low %v603, %v604
    %v699 = vunpack.c.l.s4 1983009808
    %v700 = vunpack.c.0.s8 %v699
    %v701 = vlaneseq
    %v702 = vshrl.u32 %v701, 7
    %v703 = vsub.s32 %v700, %v702
    %v704 = vrot.slane %v697, %v703
    %v705 = vcombine.low %v680, %v688
    %v706 = vcombine.high %v680, %v688
    %v708 = vunpack.c.l.s4 1934713408
    %v709 = vunpack.c.0.s8 %v708
    %v710 = vlaneseq
    %v711 = vshrl.u32 %v710, 7
    %v712 = vsub.s32 %v709, %v711
    %v713 = vrot.slane %v705, %v712
    %v715 = vunpack.c.l.s4 1934713408
    %v716 = vunpack.c.0.s8 %v715
    %v717 = vlaneseq
    %v718 = vshrl.u32 %v717, 7
    %v719 = vsub.s32 %v716, %v718
    %v720 = vrot.slane %v706, %v719
    %v721 = vcombine.low %v696, %v704
    %v722 = vcombine.high %v696, %v704
    %v724 = vunpack.c.l.s4 1934713408
    %v725 = vunpack.c.0.s8 %v724
    %v726 = vlaneseq
    %v727 = vshrl.u32 %v726, 7
    %v728 = vsub.s32 %v725, %v727
    %v729 = vrot.slane %v721, %v728
    %v731 = vunpack.c.l.s4 1934713408
    %v732 = vunpack.c.0.s8 %v731
    %v733 = vlaneseq
    %v734 = vshrl.u32 %v733, 7
    %v735 = vsub.s32 %v732, %v734
    %v736 = vrot.slane %v722, %v735
    %v737 = vcombine.low %v713, %v729
    %v738 = vcombine.high %v713, %v729
    %v739 = vcombine.low %v720, %v736
    %v740 = vcombine.high %v720, %v736
    %741 = vrot.lane.b32.xlu0 %v145, 64
    %v742 = vpop.permute.xlu0 %741
    %743 = vrot.lane.b32.xlu0 %v150, 64
    %v744 = vpop.permute.xlu0 %743
    %745 = vrot.lane.b32.xlu0 %v156, 64
    %v746 = vpop.permute.xlu0 %745
    %747 = vrot.lane.b32.xlu0 %v158, 64
    %v748 = vpop.permute.xlu0 %747
    %749 = vrot.lane.b32.xlu0 %v162, 64
    %v750 = vpop.permute.xlu0 %749
    %751 = vrot.lane.b32.xlu0 %v164, 64
    %v752 = vpop.permute.xlu0 %751
    %753 = vrot.lane.b32.xlu0 %v168, 64
    %v754 = vpop.permute.xlu0 %753
    %755 = vrot.lane.b32.xlu0 %v170, 64
    %v756 = vpop.permute.xlu0 %755
    %v765 = vcombine.low %v742, %v750
    %v766 = vcombine.high %v742, %v750
    %v768 = vunpack.c.l.s4 1983009808
    %v769 = vunpack.c.0.s8 %v768
    %v770 = vlaneseq
    %v771 = vshrl.u32 %v770, 7
    %v772 = vsub.s32 %v769, %v771
    %v773 = vrot.slane %v765, %v772
    %v775 = vunpack.c.l.s4 1983009808
    %v776 = vunpack.c.0.s8 %v775
    %v777 = vlaneseq
    %v778 = vshrl.u32 %v777, 7
    %v779 = vsub.s32 %v776, %v778
    %v780 = vrot.slane %v766, %v779
    %v781 = vcombine.low %v746, %v754
    %v782 = vcombine.high %v746, %v754
    %v784 = vunpack.c.l.s4 1983009808
    %v785 = vunpack.c.0.s8 %v784
    %v786 = vlaneseq
    %v787 = vshrl.u32 %v786, 7
    %v788 = vsub.s32 %v785, %v787
    %v789 = vrot.slane %v781, %v788
    %v791 = vunpack.c.l.s4 1983009808
    %v792 = vunpack.c.0.s8 %v791
    %v793 = vlaneseq
    %v794 = vshrl.u32 %v793, 7
    %v795 = vsub.s32 %v792, %v794
    %v796 = vrot.slane %v782, %v795
    %v797 = vcombine.low %v773, %v789
    %v798 = vcombine.high %v773, %v789
    %v800 = vunpack.c.l.s4 1934713408
    %v801 = vunpack.c.0.s8 %v800
    %v802 = vlaneseq
    %v803 = vshrl.u32 %v802, 7
    %v804 = vsub.s32 %v801, %v803
    %v805 = vrot.slane %v797, %v804
    %v807 = vunpack.c.l.s4 1934713408
    %v808 = vunpack.c.0.s8 %v807
    %v809 = vlaneseq
    %v810 = vshrl.u32 %v809, 7
    %v811 = vsub.s32 %v808, %v810
    %v812 = vrot.slane %v798, %v811
    %v813 = vcombine.low %v780, %v796
    %v814 = vcombine.high %v780, %v796
    %v816 = vunpack.c.l.s4 1934713408
    %v817 = vunpack.c.0.s8 %v816
    %v818 = vlaneseq
    %v819 = vshrl.u32 %v818, 7
    %v820 = vsub.s32 %v817, %v819
    %v821 = vrot.slane %v813, %v820
    %v823 = vunpack.c.l.s4 1934713408
    %v824 = vunpack.c.0.s8 %v823
    %v825 = vlaneseq
    %v826 = vshrl.u32 %v825, 7
    %v827 = vsub.s32 %v824, %v826
    %v828 = vrot.slane %v814, %v827
    %v829 = vcombine.high %v805, 0.0
    %v830 = vcombine.high %v812, 0.0
    %v831 = vcombine.high %v821, 0.0
    %v832 = vcombine.high %v828, 0.0
    %v833 = vcombine.low %v744, %v752
    %v834 = vcombine.high %v744, %v752
    %v836 = vunpack.c.l.s4 1983009808
    %v837 = vunpack.c.0.s8 %v836
    %v838 = vlaneseq
    %v839 = vshrl.u32 %v838, 7
    %v840 = vsub.s32 %v837, %v839
    %v841 = vrot.slane %v833, %v840
    %v843 = vunpack.c.l.s4 1983009808
    %v844 = vunpack.c.0.s8 %v843
    %v845 = vlaneseq
    %v846 = vshrl.u32 %v845, 7
    %v847 = vsub.s32 %v844, %v846
    %v848 = vrot.slane %v834, %v847
    %v849 = vcombine.low %v748, %v756
    %v850 = vcombine.high %v748, %v756
    %v852 = vunpack.c.l.s4 1983009808
    %v853 = vunpack.c.0.s8 %v852
    %v854 = vlaneseq
    %v855 = vshrl.u32 %v854, 7
    %v856 = vsub.s32 %v853, %v855
    %v857 = vrot.slane %v849, %v856
    %v859 = vunpack.c.l.s4 1983009808
    %v860 = vunpack.c.0.s8 %v859
    %v861 = vlaneseq
    %v862 = vshrl.u32 %v861, 7
    %v863 = vsub.s32 %v860, %v862
    %v864 = vrot.slane %v850, %v863
    %v865 = vcombine.low %v841, %v857
    %v866 = vcombine.high %v841, %v857
    %v868 = vunpack.c.l.s4 1934713408
    %v869 = vunpack.c.0.s8 %v868
    %v870 = vlaneseq
    %v871 = vshrl.u32 %v870, 7
    %v872 = vsub.s32 %v869, %v871
    %v873 = vrot.slane %v865, %v872
    %v875 = vunpack.c.l.s4 1934713408
    %v876 = vunpack.c.0.s8 %v875
    %v877 = vlaneseq
    %v878 = vshrl.u32 %v877, 7
    %v879 = vsub.s32 %v876, %v878
    %v880 = vrot.slane %v866, %v879
    %v881 = vcombine.low %v848, %v864
    %v882 = vcombine.high %v848, %v864
    %v884 = vunpack.c.l.s4 1934713408
    %v885 = vunpack.c.0.s8 %v884
    %v886 = vlaneseq
    %v887 = vshrl.u32 %v886, 7
    %v888 = vsub.s32 %v885, %v887
    %v889 = vrot.slane %v881, %v888
    %v891 = vunpack.c.l.s4 1934713408
    %v892 = vunpack.c.0.s8 %v891
    %v893 = vlaneseq
    %v894 = vshrl.u32 %v893, 7
    %v895 = vsub.s32 %v892, %v894
    %v896 = vrot.slane %v882, %v895
    %v897 = vcombine.high %v873, 0.0
    %v898 = vcombine.high %v880, 0.0
    %v899 = vcombine.high %v889, 0.0
    %v900 = vcombine.high %v896, 0.0
    %v901 = vcombine.low %v805, %v812
    %v903 = vunpack.c.l.s4 1983009808
    %v904 = vunpack.c.0.s8 %v903
    %v905 = vlaneseq
    %v906 = vshrl.u32 %v905, 7
    %v907 = vsub.s32 %v904, %v906
    %v908 = vrot.slane %v901, %v907
    %v909 = vcombine.low %v829, %v830
    %v911 = vunpack.c.l.s4 1983009808
    %v912 = vunpack.c.0.s8 %v911
    %v913 = vlaneseq
    %v914 = vshrl.u32 %v913, 7
    %v915 = vsub.s32 %v912, %v914
    %v916 = vrot.slane %v909, %v915
    %v917 = vcombine.low %v821, %v828
    %v919 = vunpack.c.l.s4 1983009808
    %v920 = vunpack.c.0.s8 %v919
    %v921 = vlaneseq
    %v922 = vshrl.u32 %v921, 7
    %v923 = vsub.s32 %v920, %v922
    %v924 = vrot.slane %v917, %v923
    %v925 = vcombine.low %v831, %v832
    %v927 = vunpack.c.l.s4 1983009808
    %v928 = vunpack.c.0.s8 %v927
    %v929 = vlaneseq
    %v930 = vshrl.u32 %v929, 7
    %v931 = vsub.s32 %v928, %v930
    %v932 = vrot.slane %v925, %v931
    %v933 = vcombine.low %v908, %v916
    %v934 = vcombine.high %v908, %v916
    %v936 = vunpack.c.l.s4 1934713408
    %v937 = vunpack.c.0.s8 %v936
    %v938 = vlaneseq
    %v939 = vshrl.u32 %v938, 7
    %v940 = vsub.s32 %v937, %v939
    %v941 = vrot.slane %v933, %v940
    %v943 = vunpack.c.l.s4 1934713408
    %v944 = vunpack.c.0.s8 %v943
    %v945 = vlaneseq
    %v946 = vshrl.u32 %v945, 7
    %v947 = vsub.s32 %v944, %v946
    %v948 = vrot.slane %v934, %v947
    %v949 = vcombine.low %v924, %v932
    %v950 = vcombine.high %v924, %v932
    %v952 = vunpack.c.l.s4 1934713408
    %v953 = vunpack.c.0.s8 %v952
    %v954 = vlaneseq
    %v955 = vshrl.u32 %v954, 7
    %v956 = vsub.s32 %v953, %v955
    %v957 = vrot.slane %v949, %v956
    %v959 = vunpack.c.l.s4 1934713408
    %v960 = vunpack.c.0.s8 %v959
    %v961 = vlaneseq
    %v962 = vshrl.u32 %v961, 7
    %v963 = vsub.s32 %v960, %v962
    %v964 = vrot.slane %v950, %v963
    %v965 = vcombine.low %v941, %v957
    %v966 = vcombine.high %v941, %v957
    %v967 = vcombine.low %v948, %v964
    %v968 = vcombine.high %v948, %v964
    %v969 = vcombine.low %v873, %v880
    %v971 = vunpack.c.l.s4 1983009808
    %v972 = vunpack.c.0.s8 %v971
    %v973 = vlaneseq
    %v974 = vshrl.u32 %v973, 7
    %v975 = vsub.s32 %v972, %v974
    %v976 = vrot.slane %v969, %v975
    %v977 = vcombine.low %v897, %v898
    %v979 = vunpack.c.l.s4 1983009808
    %v980 = vunpack.c.0.s8 %v979
    %v981 = vlaneseq
    %v982 = vshrl.u32 %v981, 7
    %v983 = vsub.s32 %v980, %v982
    %v984 = vrot.slane %v977, %v983
    %v985 = vcombine.low %v889, %v896
    %v987 = vunpack.c.l.s4 1983009808
    %v988 = vunpack.c.0.s8 %v987
    %v989 = vlaneseq
    %v990 = vshrl.u32 %v989, 7
    %v991 = vsub.s32 %v988, %v990
    %v992 = vrot.slane %v985, %v991
    %v993 = vcombine.low %v899, %v900
    %v995 = vunpack.c.l.s4 1983009808
    %v996 = vunpack.c.0.s8 %v995
    %v997 = vlaneseq
    %v998 = vshrl.u32 %v997, 7
    %v999 = vsub.s32 %v996, %v998
    %v1000 = vrot.slane %v993, %v999
    %v1001 = vcombine.low %v976, %v984
    %v1002 = vcombine.high %v976, %v984
    %v1004 = vunpack.c.l.s4 1934713408
    %v1005 = vunpack.c.0.s8 %v1004
    %v1006 = vlaneseq
    %v1007 = vshrl.u32 %v1006, 7
    %v1008 = vsub.s32 %v1005, %v1007
    %v1009 = vrot.slane %v1001, %v1008
    %v1011 = vunpack.c.l.s4 1934713408
    %v1012 = vunpack.c.0.s8 %v1011
    %v1013 = vlaneseq
    %v1014 = vshrl.u32 %v1013, 7
    %v1015 = vsub.s32 %v1012, %v1014
    %v1016 = vrot.slane %v1002, %v1015
    %v1017 = vcombine.low %v992, %v1000
    %v1018 = vcombine.high %v992, %v1000
    %v1020 = vunpack.c.l.s4 1934713408
    %v1021 = vunpack.c.0.s8 %v1020
    %v1022 = vlaneseq
    %v1023 = vshrl.u32 %v1022, 7
    %v1024 = vsub.s32 %v1021, %v1023
    %v1025 = vrot.slane %v1017, %v1024
    %v1027 = vunpack.c.l.s4 1934713408
    %v1028 = vunpack.c.0.s8 %v1027
    %v1029 = vlaneseq
    %v1030 = vshrl.u32 %v1029, 7
    %v1031 = vsub.s32 %v1028, %v1030
    %v1032 = vrot.slane %v1018, %v1031
    %v1033 = vcombine.low %v1009, %v1025
    %v1034 = vcombine.high %v1009, %v1025
    %v1035 = vcombine.low %v1016, %v1032
    %v1036 = vcombine.high %v1016, %v1032
    %vm1037 = vcmask 64512
    %v1039 = vsel %vm1037, %v373, 0
    %v1042 = vsel %vm1037, %v669, 0
    %1044 = vmatprep.subr.mxu0 0.0
    %1045 = vmatpush1.xpose.msra.mxu0 %v1042
    %1046 = vmatprep.subr.mxu0 0.0
    %1047 = vmatpush1.xpose.msra.mxu0 0.0
    %1048 = vmatprep.subr.mxu0 0.0
    %1049 = vmatpush1.xpose.msra.mxu0 0.0
    %1050 = vmatprep.subr.mxu0 0.0
    %1051 = vmatpush1.xpose.msra.mxu0 0.0
    %1052 = vmatprep.subr.mxu0 0.0
    %1053 = vmatpush1.xpose.msra.mxu0 0.0
    %1054 = vmatprep.subr.mxu0 0.0
    %1055 = vmatpush1.xpose.msra.mxu0 0.0
    %1056 = vmatprep.subr.mxu0 0.0
    %1057 = vmatpush1.xpose.msra.mxu0 0.0
    %1058 = vmatprep.subr.mxu0 0.0
    %1059 = vmatpush1.xpose.msra.mxu0 0.0
    %1060 = vmatprep.subr.mxu0 0.0
    %1061 = vmatpush1.xpose.msra.mxu0 0.0
    %1062 = vmatprep.subr.mxu0 0.0
    %1063 = vmatpush1.xpose.msra.mxu0 0.0
    %1064 = vmatprep.subr.mxu0 0.0
    %1065 = vmatpush1.xpose.msra.mxu0 0.0
    %1066 = vmatprep.subr.mxu0 0.0
    %1067 = vmatpush1.xpose.msra.mxu0 0.0
    %1068 = vmatprep.subr.mxu0 0.0
    %1069 = vmatpush1.xpose.msra.mxu0 0.0
    %1070 = vmatprep.subr.mxu0 0.0
    %1071 = vmatpush1.xpose.msra.mxu0 0.0
    %1072 = vmatprep.subr.mxu0 0.0
    %1073 = vmatpush1.xpose.msra.mxu0 0.0
    %1074 = vmatprep.subr.mxu0 0.0
    %1075 = vmatpush1.xpose.msra.mxu0 0.0
    %1076 = vmatprep.subr.mxu0 0.0
    %1077 = vmatpush1.xpose.msra.mxu0 0.0
    %1078 = vmatprep.subr.mxu0 0.0
    %1079 = vmatpush1.xpose.msra.mxu0 0.0
    %1080 = vmatprep.subr.mxu0 0.0
    %1081 = vmatpush1.xpose.msra.mxu0 0.0
    %1082 = vmatprep.subr.mxu0 0.0
    %1083 = vmatpush1.xpose.msra.mxu0 0.0
    %1084 = vmatprep.subr.mxu0 0.0
    %1085 = vmatpush1.xpose.msra.mxu0 0.0
    %1086 = vmatprep.subr.mxu0 0.0
    %1087 = vmatpush1.xpose.msra.mxu0 0.0
    %1088 = vmatprep.subr.mxu0 0.0
    %1089 = vmatpush1.xpose.msra.mxu0 0.0
    %1090 = vmatprep.subr.mxu0 0.0
    %1091 = vmatpush1.xpose.msra.mxu0 0.0
    %1092 = vmatprep.subr.mxu0 0.0
    %1093 = vmatpush1.xpose.msra.mxu0 0.0
    %1094 = vmatprep.subr.mxu0 0.0
    %1095 = vmatpush1.xpose.msra.mxu0 0.0
    %1096 = vmatprep.subr.mxu0 0.0
    %1097 = vmatpush1.xpose.msra.mxu0 0.0
    %1098 = vmatprep.subr.mxu0 0.0
    %1099 = vmatpush1.xpose.msra.mxu0 0.0
    %1100 = vmatprep.subr.mxu0 0.0
    %1101 = vmatpush1.xpose.msra.mxu0 0.0
    %1102 = vmatprep.subr.mxu0 0.0
    %1103 = vmatpush1.xpose.msra.mxu0 0.0
    %1104 = vmatprep.subr.mxu0 0.0
    %1105 = vmatpush1.xpose.msra.mxu0 0.0
    %1106 = vmatprep.subr.mxu0 0.0
    %1107 = vmatpush1.xpose.msra.mxu0 0.0
    %1108 = vmatprep.mubr.f32.mxu0 0.0
    %1109 = vmatmul.mubr.f32.gmra.mrb[0].mxu0 %v1039
    %v1110 = vpop.f32.mrb[0].mxu0
    %v1111 = vadd.f32 0.0, %v1110
    %v1112 = vpop.f32.mrb[0].mxu0
    %1113 = vdwg.mxu0
    %v1115 = vsel %vm1037, %v374, 0
    %v1118 = vsel %vm1037, %v670, 0
    %1120 = vmatprep.subr.mxu0 0.0
    %1121 = vmatpush1.xpose.msra.mxu0 %v1118
    %1122 = vmatprep.subr.mxu0 0.0
    %1123 = vmatpush1.xpose.msra.mxu0 0.0
    %1124 = vmatprep.subr.mxu0 0.0
    %1125 = vmatpush1.xpose.msra.mxu0 0.0
    %1126 = vmatprep.subr.mxu0 0.0
    %1127 = vmatpush1.xpose.msra.mxu0 0.0
    %1128 = vmatprep.subr.mxu0 0.0
    %1129 = vmatpush1.xpose.msra.mxu0 0.0
    %1130 = vmatprep.subr.mxu0 0.0
    %1131 = vmatpush1.xpose.msra.mxu0 0.0
    %1132 = vmatprep.subr.mxu0 0.0
    %1133 = vmatpush1.xpose.msra.mxu0 0.0
    %1134 = vmatprep.subr.mxu0 0.0
    %1135 = vmatpush1.xpose.msra.mxu0 0.0
    %1136 = vmatprep.subr.mxu0 0.0
    %1137 = vmatpush1.xpose.msra.mxu0 0.0
    %1138 = vmatprep.subr.mxu0 0.0
    %1139 = vmatpush1.xpose.msra.mxu0 0.0
    %1140 = vmatprep.subr.mxu0 0.0
    %1141 = vmatpush1.xpose.msra.mxu0 0.0
    %1142 = vmatprep.subr.mxu0 0.0
    %1143 = vmatpush1.xpose.msra.mxu0 0.0
    %1144 = vmatprep.subr.mxu0 0.0
    %1145 = vmatpush1.xpose.msra.mxu0 0.0
    %1146 = vmatprep.subr.mxu0 0.0
    %1147 = vmatpush1.xpose.msra.mxu0 0.0
    %1148 = vmatprep.subr.mxu0 0.0
    %1149 = vmatpush1.xpose.msra.mxu0 0.0
    %1150 = vmatprep.subr.mxu0 0.0
    %1151 = vmatpush1.xpose.msra.mxu0 0.0
    %1152 = vmatprep.subr.mxu0 0.0
    %1153 = vmatpush1.xpose.msra.mxu0 0.0
    %1154 = vmatprep.subr.mxu0 0.0
    %1155 = vmatpush1.xpose.msra.mxu0 0.0
    %1156 = vmatprep.subr.mxu0 0.0
    %1157 = vmatpush1.xpose.msra.mxu0 0.0
    %1158 = vmatprep.subr.mxu0 0.0
    %1159 = vmatpush1.xpose.msra.mxu0 0.0
    %1160 = vmatprep.subr.mxu0 0.0
    %1161 = vmatpush1.xpose.msra.mxu0 0.0
    %1162 = vmatprep.subr.mxu0 0.0
    %1163 = vmatpush1.xpose.msra.mxu0 0.0
    %1164 = vmatprep.subr.mxu0 0.0
    %1165 = vmatpush1.xpose.msra.mxu0 0.0
    %1166 = vmatprep.subr.mxu0 0.0
    %1167 = vmatpush1.xpose.msra.mxu0 0.0
    %1168 = vmatprep.subr.mxu0 0.0
    %1169 = vmatpush1.xpose.msra.mxu0 0.0
    %1170 = vmatprep.subr.mxu0 0.0
    %1171 = vmatpush1.xpose.msra.mxu0 0.0
    %1172 = vmatprep.subr.mxu0 0.0
    %1173 = vmatpush1.xpose.msra.mxu0 0.0
    %1174 = vmatprep.subr.mxu0 0.0
    %1175 = vmatpush1.xpose.msra.mxu0 0.0
    %1176 = vmatprep.subr.mxu0 0.0
    %1177 = vmatpush1.xpose.msra.mxu0 0.0
    %1178 = vmatprep.subr.mxu0 0.0
    %1179 = vmatpush1.xpose.msra.mxu0 0.0
    %1180 = vmatprep.subr.mxu0 0.0
    %1181 = vmatpush1.xpose.msra.mxu0 0.0
    %1182 = vmatprep.subr.mxu0 0.0
    %1183 = vmatpush1.xpose.msra.mxu0 0.0
    %1184 = vmatprep.mubr.f32.mxu0 0.0
    %1185 = vmatmul.mubr.f32.gmra.mrb[0].mxu0 %v1115
    %v1186 = vpop.f32.mrb[0].mxu0
    %v1187 = vadd.f32 0.0, %v1186
    %v1188 = vpop.f32.mrb[0].mxu0
    %1189 = vdwg.mxu0
    %v1191 = vsel %vm1037, %v375, 0
    %v1194 = vsel %vm1037, %v671, 0
    %1196 = vmatprep.subr.mxu0 0.0
    %1197 = vmatpush1.xpose.msra.mxu0 %v1194
    %1198 = vmatprep.subr.mxu0 0.0
    %1199 = vmatpush1.xpose.msra.mxu0 0.0
    %1200 = vmatprep.subr.mxu0 0.0
    %1201 = vmatpush1.xpose.msra.mxu0 0.0
    %1202 = vmatprep.subr.mxu0 0.0
    %1203 = vmatpush1.xpose.msra.mxu0 0.0
    %1204 = vmatprep.subr.mxu0 0.0
    %1205 = vmatpush1.xpose.msra.mxu0 0.0
    %1206 = vmatprep.subr.mxu0 0.0
    %1207 = vmatpush1.xpose.msra.mxu0 0.0
    %1208 = vmatprep.subr.mxu0 0.0
    %1209 = vmatpush1.xpose.msra.mxu0 0.0
    %1210 = vmatprep.subr.mxu0 0.0
    %1211 = vmatpush1.xpose.msra.mxu0 0.0
    %1212 = vmatprep.subr.mxu0 0.0
    %1213 = vmatpush1.xpose.msra.mxu0 0.0
    %1214 = vmatprep.subr.mxu0 0.0
    %1215 = vmatpush1.xpose.msra.mxu0 0.0
    %1216 = vmatprep.subr.mxu0 0.0
    %1217 = vmatpush1.xpose.msra.mxu0 0.0
    %1218 = vmatprep.subr.mxu0 0.0
    %1219 = vmatpush1.xpose.msra.mxu0 0.0
    %1220 = vmatprep.subr.mxu0 0.0
    %1221 = vmatpush1.xpose.msra.mxu0 0.0
    %1222 = vmatprep.subr.mxu0 0.0
    %1223 = vmatpush1.xpose.msra.mxu0 0.0
    %1224 = vmatprep.subr.mxu0 0.0
    %1225 = vmatpush1.xpose.msra.mxu0 0.0
    %1226 = vmatprep.subr.mxu0 0.0
    %1227 = vmatpush1.xpose.msra.mxu0 0.0
    %1228 = vmatprep.subr.mxu0 0.0
    %1229 = vmatpush1.xpose.msra.mxu0 0.0
    %1230 = vmatprep.subr.mxu0 0.0
    %1231 = vmatpush1.xpose.msra.mxu0 0.0
    %1232 = vmatprep.subr.mxu0 0.0
    %1233 = vmatpush1.xpose.msra.mxu0 0.0
    %1234 = vmatprep.subr.mxu0 0.0
    %1235 = vmatpush1.xpose.msra.mxu0 0.0
    %1236 = vmatprep.subr.mxu0 0.0
    %1237 = vmatpush1.xpose.msra.mxu0 0.0
    %1238 = vmatprep.subr.mxu0 0.0
    %1239 = vmatpush1.xpose.msra.mxu0 0.0
    %1240 = vmatprep.subr.mxu0 0.0
    %1241 = vmatpush1.xpose.msra.mxu0 0.0
    %1242 = vmatprep.subr.mxu0 0.0
    %1243 = vmatpush1.xpose.msra.mxu0 0.0
    %1244 = vmatprep.subr.mxu0 0.0
    %1245 = vmatpush1.xpose.msra.mxu0 0.0
    %1246 = vmatprep.subr.mxu0 0.0
    %1247 = vmatpush1.xpose.msra.mxu0 0.0
    %1248 = vmatprep.subr.mxu0 0.0
    %1249 = vmatpush1.xpose.msra.mxu0 0.0
    %1250 = vmatprep.subr.mxu0 0.0
    %1251 = vmatpush1.xpose.msra.mxu0 0.0
    %1252 = vmatprep.subr.mxu0 0.0
    %1253 = vmatpush1.xpose.msra.mxu0 0.0
    %1254 = vmatprep.subr.mxu0 0.0
    %1255 = vmatpush1.xpose.msra.mxu0 0.0
    %1256 = vmatprep.subr.mxu0 0.0
    %1257 = vmatpush1.xpose.msra.mxu0 0.0
    %1258 = vmatprep.subr.mxu0 0.0
    %1259 = vmatpush1.xpose.msra.mxu0 0.0
    %1260 = vmatprep.mubr.f32.mxu0 0.0
    %1261 = vmatmul.mubr.f32.gmra.mrb[0].mxu0 %v1191
    %v1262 = vpop.f32.mrb[0].mxu0
    %v1263 = vadd.f32 0.0, %v1262
    %v1264 = vpop.f32.mrb[0].mxu0
    %1265 = vdwg.mxu0
    %v1267 = vsel %vm1037, %v376, 0
    %v1270 = vsel %vm1037, %v672, 0
    %1272 = vmatprep.subr.mxu0 0.0
    %1273 = vmatpush1.xpose.msra.mxu0 %v1270
    %1274 = vmatprep.subr.mxu0 0.0
    %1275 = vmatpush1.xpose.msra.mxu0 0.0
    %1276 = vmatprep.subr.mxu0 0.0
    %1277 = vmatpush1.xpose.msra.mxu0 0.0
    %1278 = vmatprep.subr.mxu0 0.0
    %1279 = vmatpush1.xpose.msra.mxu0 0.0
    %1280 = vmatprep.subr.mxu0 0.0
    %1281 = vmatpush1.xpose.msra.mxu0 0.0
    %1282 = vmatprep.subr.mxu0 0.0
    %1283 = vmatpush1.xpose.msra.mxu0 0.0
    %1284 = vmatprep.subr.mxu0 0.0
    %1285 = vmatpush1.xpose.msra.mxu0 0.0
    %1286 = vmatprep.subr.mxu0 0.0
    %1287 = vmatpush1.xpose.msra.mxu0 0.0
    %1288 = vmatprep.subr.mxu0 0.0
    %1289 = vmatpush1.xpose.msra.mxu0 0.0
    %1290 = vmatprep.subr.mxu0 0.0
    %1291 = vmatpush1.xpose.msra.mxu0 0.0
    %1292 = vmatprep.subr.mxu0 0.0
    %1293 = vmatpush1.xpose.msra.mxu0 0.0
    %1294 = vmatprep.subr.mxu0 0.0
    %1295 = vmatpush1.xpose.msra.mxu0 0.0
    %1296 = vmatprep.subr.mxu0 0.0
    %1297 = vmatpush1.xpose.msra.mxu0 0.0
    %1298 = vmatprep.subr.mxu0 0.0
    %1299 = vmatpush1.xpose.msra.mxu0 0.0
    %1300 = vmatprep.subr.mxu0 0.0
    %1301 = vmatpush1.xpose.msra.mxu0 0.0
    %1302 = vmatprep.subr.mxu0 0.0
    %1303 = vmatpush1.xpose.msra.mxu0 0.0
    %1304 = vmatprep.subr.mxu0 0.0
    %1305 = vmatpush1.xpose.msra.mxu0 0.0
    %1306 = vmatprep.subr.mxu0 0.0
    %1307 = vmatpush1.xpose.msra.mxu0 0.0
    %1308 = vmatprep.subr.mxu0 0.0
    %1309 = vmatpush1.xpose.msra.mxu0 0.0
    %1310 = vmatprep.subr.mxu0 0.0
    %1311 = vmatpush1.xpose.msra.mxu0 0.0
    %1312 = vmatprep.subr.mxu0 0.0
    %1313 = vmatpush1.xpose.msra.mxu0 0.0
    %1314 = vmatprep.subr.mxu0 0.0
    %1315 = vmatpush1.xpose.msra.mxu0 0.0
    %1316 = vmatprep.subr.mxu0 0.0
    %1317 = vmatpush1.xpose.msra.mxu0 0.0
    %1318 = vmatprep.subr.mxu0 0.0
    %1319 = vmatpush1.xpose.msra.mxu0 0.0
    %1320 = vmatprep.subr.mxu0 0.0
    %1321 = vmatpush1.xpose.msra.mxu0 0.0
    %1322 = vmatprep.subr.mxu0 0.0
    %1323 = vmatpush1.xpose.msra.mxu0 0.0
    %1324 = vmatprep.subr.mxu0 0.0
    %1325 = vmatpush1.xpose.msra.mxu0 0.0
    %1326 = vmatprep.subr.mxu0 0.0
    %1327 = vmatpush1.xpose.msra.mxu0 0.0
    %1328 = vmatprep.subr.mxu0 0.0
    %1329 = vmatpush1.xpose.msra.mxu0 0.0
    %1330 = vmatprep.subr.mxu0 0.0
    %1331 = vmatpush1.xpose.msra.mxu0 0.0
    %1332 = vmatprep.subr.mxu0 0.0
    %1333 = vmatpush1.xpose.msra.mxu0 0.0
    %1334 = vmatprep.subr.mxu0 0.0
    %1335 = vmatpush1.xpose.msra.mxu0 0.0
    %1336 = vmatprep.mubr.f32.mxu0 0.0
    %1337 = vmatmul.mubr.f32.gmra.mrb[0].mxu0 %v1267
    %v1338 = vpop.f32.mrb[0].mxu0
    %v1339 = vadd.f32 0.0, %v1338
    %v1340 = vpop.f32.mrb[0].mxu0
    %1341 = vdwg.mxu0
    %v1343 = vsel %vm1037, %v441, 0
    %v1346 = vsel %vm1037, %v737, 0
    %1348 = vmatprep.subr.mxu0 0.0
    %1349 = vmatpush1.xpose.msra.mxu0 %v1346
    %1350 = vmatprep.subr.mxu0 0.0
    %1351 = vmatpush1.xpose.msra.mxu0 0.0
    %1352 = vmatprep.subr.mxu0 0.0
    %1353 = vmatpush1.xpose.msra.mxu0 0.0
    %1354 = vmatprep.subr.mxu0 0.0
    %1355 = vmatpush1.xpose.msra.mxu0 0.0
    %1356 = vmatprep.subr.mxu0 0.0
    %1357 = vmatpush1.xpose.msra.mxu0 0.0
    %1358 = vmatprep.subr.mxu0 0.0
    %1359 = vmatpush1.xpose.msra.mxu0 0.0
    %1360 = vmatprep.subr.mxu0 0.0
    %1361 = vmatpush1.xpose.msra.mxu0 0.0
    %1362 = vmatprep.subr.mxu0 0.0
    %1363 = vmatpush1.xpose.msra.mxu0 0.0
    %1364 = vmatprep.subr.mxu0 0.0
    %1365 = vmatpush1.xpose.msra.mxu0 0.0
    %1366 = vmatprep.subr.mxu0 0.0
    %1367 = vmatpush1.xpose.msra.mxu0 0.0
    %1368 = vmatprep.subr.mxu0 0.0
    %1369 = vmatpush1.xpose.msra.mxu0 0.0
    %1370 = vmatprep.subr.mxu0 0.0
    %1371 = vmatpush1.xpose.msra.mxu0 0.0
    %1372 = vmatprep.subr.mxu0 0.0
    %1373 = vmatpush1.xpose.msra.mxu0 0.0
    %1374 = vmatprep.subr.mxu0 0.0
    %1375 = vmatpush1.xpose.msra.mxu0 0.0
    %1376 = vmatprep.subr.mxu0 0.0
    %1377 = vmatpush1.xpose.msra.mxu0 0.0
    %1378 = vmatprep.subr.mxu0 0.0
    %1379 = vmatpush1.xpose.msra.mxu0 0.0
    %1380 = vmatprep.subr.mxu0 0.0
    %1381 = vmatpush1.xpose.msra.mxu0 0.0
    %1382 = vmatprep.subr.mxu0 0.0
    %1383 = vmatpush1.xpose.msra.mxu0 0.0
    %1384 = vmatprep.subr.mxu0 0.0
    %1385 = vmatpush1.xpose.msra.mxu0 0.0
    %1386 = vmatprep.subr.mxu0 0.0
    %1387 = vmatpush1.xpose.msra.mxu0 0.0
    %1388 = vmatprep.subr.mxu0 0.0
    %1389 = vmatpush1.xpose.msra.mxu0 0.0
    %1390 = vmatprep.subr.mxu0 0.0
    %1391 = vmatpush1.xpose.msra.mxu0 0.0
    %1392 = vmatprep.subr.mxu0 0.0
    %1393 = vmatpush1.xpose.msra.mxu0 0.0
    %1394 = vmatprep.subr.mxu0 0.0
    %1395 = vmatpush1.xpose.msra.mxu0 0.0
    %1396 = vmatprep.subr.mxu0 0.0
    %1397 = vmatpush1.xpose.msra.mxu0 0.0
    %1398 = vmatprep.subr.mxu0 0.0
    %1399 = vmatpush1.xpose.msra.mxu0 0.0
    %1400 = vmatprep.subr.mxu0 0.0
    %1401 = vmatpush1.xpose.msra.mxu0 0.0
    %1402 = vmatprep.subr.mxu0 0.0
    %1403 = vmatpush1.xpose.msra.mxu0 0.0
    %1404 = vmatprep.subr.mxu0 0.0
    %1405 = vmatpush1.xpose.msra.mxu0 0.0
    %1406 = vmatprep.subr.mxu0 0.0
    %1407 = vmatpush1.xpose.msra.mxu0 0.0
    %1408 = vmatprep.subr.mxu0 0.0
    %1409 = vmatpush1.xpose.msra.mxu0 0.0
    %1410 = vmatprep.subr.mxu0 0.0
    %1411 = vmatpush1.xpose.msra.mxu0 0.0
    %1412 = vmatprep.mubr.f32.mxu0 0.0
    %1413 = vmatmul.mubr.f32.gmra.mrb[0].mxu0 %v1343
    %v1414 = vpop.f32.mrb[0].mxu0
    %v1415 = vadd.f32 0.0, %v1414
    %v1416 = vpop.f32.mrb[0].mxu0
    %1417 = vdwg.mxu0
    %v1419 = vsel %vm1037, %v442, 0
    %v1422 = vsel %vm1037, %v738, 0
    %1424 = vmatprep.subr.mxu0 0.0
    %1425 = vmatpush1.xpose.msra.mxu0 %v1422
    %1426 = vmatprep.subr.mxu0 0.0
    %1427 = vmatpush1.xpose.msra.mxu0 0.0
    %1428 = vmatprep.subr.mxu0 0.0
    %1429 = vmatpush1.xpose.msra.mxu0 0.0
    %1430 = vmatprep.subr.mxu0 0.0
    %1431 = vmatpush1.xpose.msra.mxu0 0.0
    %1432 = vmatprep.subr.mxu0 0.0
    %1433 = vmatpush1.xpose.msra.mxu0 0.0
    %1434 = vmatprep.subr.mxu0 0.0
    %1435 = vmatpush1.xpose.msra.mxu0 0.0
    %1436 = vmatprep.subr.mxu0 0.0
    %1437 = vmatpush1.xpose.msra.mxu0 0.0
    %1438 = vmatprep.subr.mxu0 0.0
    %1439 = vmatpush1.xpose.msra.mxu0 0.0
    %1440 = vmatprep.subr.mxu0 0.0
    %1441 = vmatpush1.xpose.msra.mxu0 0.0
    %1442 = vmatprep.subr.mxu0 0.0
    %1443 = vmatpush1.xpose.msra.mxu0 0.0
    %1444 = vmatprep.subr.mxu0 0.0
    %1445 = vmatpush1.xpose.msra.mxu0 0.0
    %1446 = vmatprep.subr.mxu0 0.0
    %1447 = vmatpush1.xpose.msra.mxu0 0.0
    %1448 = vmatprep.subr.mxu0 0.0
    %1449 = vmatpush1.xpose.msra.mxu0 0.0
    %1450 = vmatprep.subr.mxu0 0.0
    %1451 = vmatpush1.xpose.msra.mxu0 0.0
    %1452 = vmatprep.subr.mxu0 0.0
    %1453 = vmatpush1.xpose.msra.mxu0 0.0
    %1454 = vmatprep.subr.mxu0 0.0
    %1455 = vmatpush1.xpose.msra.mxu0 0.0
    %1456 = vmatprep.subr.mxu0 0.0
    %1457 = vmatpush1.xpose.msra.mxu0 0.0
    %1458 = vmatprep.subr.mxu0 0.0
    %1459 = vmatpush1.xpose.msra.mxu0 0.0
    %1460 = vmatprep.subr.mxu0 0.0
    %1461 = vmatpush1.xpose.msra.mxu0 0.0
    %1462 = vmatprep.subr.mxu0 0.0
    %1463 = vmatpush1.xpose.msra.mxu0 0.0
    %1464 = vmatprep.subr.mxu0 0.0
    %1465 = vmatpush1.xpose.msra.mxu0 0.0
    %1466 = vmatprep.subr.mxu0 0.0
    %1467 = vmatpush1.xpose.msra.mxu0 0.0
    %1468 = vmatprep.subr.mxu0 0.0
    %1469 = vmatpush1.xpose.msra.mxu0 0.0
    %1470 = vmatprep.subr.mxu0 0.0
    %1471 = vmatpush1.xpose.msra.mxu0 0.0
    %1472 = vmatprep.subr.mxu0 0.0
    %1473 = vmatpush1.xpose.msra.mxu0 0.0
    %1474 = vmatprep.subr.mxu0 0.0
    %1475 = vmatpush1.xpose.msra.mxu0 0.0
    %1476 = vmatprep.subr.mxu0 0.0
    %1477 = vmatpush1.xpose.msra.mxu0 0.0
    %1478 = vmatprep.subr.mxu0 0.0
    %1479 = vmatpush1.xpose.msra.mxu0 0.0
    %1480 = vmatprep.subr.mxu0 0.0
    %1481 = vmatpush1.xpose.msra.mxu0 0.0
    %1482 = vmatprep.subr.mxu0 0.0
    %1483 = vmatpush1.xpose.msra.mxu0 0.0
    %1484 = vmatprep.subr.mxu0 0.0
    %1485 = vmatpush1.xpose.msra.mxu0 0.0
    %1486 = vmatprep.subr.mxu0 0.0
    %1487 = vmatpush1.xpose.msra.mxu0 0.0
    %1488 = vmatprep.mubr.f32.mxu0 0.0
    %1489 = vmatmul.mubr.f32.gmra.mrb[0].mxu0 %v1419
    %v1490 = vpop.f32.mrb[0].mxu0
    %v1491 = vadd.f32 0.0, %v1490
    %v1492 = vpop.f32.mrb[0].mxu0
    %1493 = vdwg.mxu0
    %v1495 = vsel %vm1037, %v443, 0
    %v1498 = vsel %vm1037, %v739, 0
    %1500 = vmatprep.subr.mxu0 0.0
    %1501 = vmatpush1.xpose.msra.mxu0 %v1498
    %1502 = vmatprep.subr.mxu0 0.0
    %1503 = vmatpush1.xpose.msra.mxu0 0.0
    %1504 = vmatprep.subr.mxu0 0.0
    %1505 = vmatpush1.xpose.msra.mxu0 0.0
    %1506 = vmatprep.subr.mxu0 0.0
    %1507 = vmatpush1.xpose.msra.mxu0 0.0
    %1508 = vmatprep.subr.mxu0 0.0
    %1509 = vmatpush1.xpose.msra.mxu0 0.0
    %1510 = vmatprep.subr.mxu0 0.0
    %1511 = vmatpush1.xpose.msra.mxu0 0.0
    %1512 = vmatprep.subr.mxu0 0.0
    %1513 = vmatpush1.xpose.msra.mxu0 0.0
    %1514 = vmatprep.subr.mxu0 0.0
    %1515 = vmatpush1.xpose.msra.mxu0 0.0
    %1516 = vmatprep.subr.mxu0 0.0
    %1517 = vmatpush1.xpose.msra.mxu0 0.0
    %1518 = vmatprep.subr.mxu0 0.0
    %1519 = vmatpush1.xpose.msra.mxu0 0.0
    %1520 = vmatprep.subr.mxu0 0.0
    %1521 = vmatpush1.xpose.msra.mxu0 0.0
    %1522 = vmatprep.subr.mxu0 0.0
    %1523 = vmatpush1.xpose.msra.mxu0 0.0
    %1524 = vmatprep.subr.mxu0 0.0
    %1525 = vmatpush1.xpose.msra.mxu0 0.0
    %1526 = vmatprep.subr.mxu0 0.0
    %1527 = vmatpush1.xpose.msra.mxu0 0.0
    %1528 = vmatprep.subr.mxu0 0.0
    %1529 = vmatpush1.xpose.msra.mxu0 0.0
    %1530 = vmatprep.subr.mxu0 0.0
    %1531 = vmatpush1.xpose.msra.mxu0 0.0
    %1532 = vmatprep.subr.mxu0 0.0
    %1533 = vmatpush1.xpose.msra.mxu0 0.0
    %1534 = vmatprep.subr.mxu0 0.0
    %1535 = vmatpush1.xpose.msra.mxu0 0.0
    %1536 = vmatprep.subr.mxu0 0.0
    %1537 = vmatpush1.xpose.msra.mxu0 0.0
    %1538 = vmatprep.subr.mxu0 0.0
    %1539 = vmatpush1.xpose.msra.mxu0 0.0
    %1540 = vmatprep.subr.mxu0 0.0
    %1541 = vmatpush1.xpose.msra.mxu0 0.0
    %1542 = vmatprep.subr.mxu0 0.0
    %1543 = vmatpush1.xpose.msra.mxu0 0.0
    %1544 = vmatprep.subr.mxu0 0.0
    %1545 = vmatpush1.xpose.msra.mxu0 0.0
    %1546 = vmatprep.subr.mxu0 0.0
    %1547 = vmatpush1.xpose.msra.mxu0 0.0
    %1548 = vmatprep.subr.mxu0 0.0
    %1549 = vmatpush1.xpose.msra.mxu0 0.0
    %1550 = vmatprep.subr.mxu0 0.0
    %1551 = vmatpush1.xpose.msra.mxu0 0.0
    %1552 = vmatprep.subr.mxu0 0.0
    %1553 = vmatpush1.xpose.msra.mxu0 0.0
    %1554 = vmatprep.subr.mxu0 0.0
    %1555 = vmatpush1.xpose.msra.mxu0 0.0
    %1556 = vmatprep.subr.mxu0 0.0
    %1557 = vmatpush1.xpose.msra.mxu0 0.0
    %1558 = vmatprep.subr.mxu0 0.0
    %1559 = vmatpush1.xpose.msra.mxu0 0.0
    %1560 = vmatprep.subr.mxu0 0.0
    %1561 = vmatpush1.xpose.msra.mxu0 0.0
    %1562 = vmatprep.subr.mxu0 0.0
    %1563 = vmatpush1.xpose.msra.mxu0 0.0
    %1564 = vmatprep.mubr.f32.mxu0 0.0
    %1565 = vmatmul.mubr.f32.gmra.mrb[0].mxu0 %v1495
    %v1566 = vpop.f32.mrb[0].mxu0
    %v1567 = vadd.f32 0.0, %v1566
    %v1568 = vpop.f32.mrb[0].mxu0
    %1569 = vdwg.mxu0
    %v1571 = vsel %vm1037, %v444, 0
    %v1574 = vsel %vm1037, %v740, 0
    %1576 = vmatprep.subr.mxu0 0.0
    %1577 = vmatpush1.xpose.msra.mxu0 %v1574
    %1578 = vmatprep.subr.mxu0 0.0
    %1579 = vmatpush1.xpose.msra.mxu0 0.0
    %1580 = vmatprep.subr.mxu0 0.0
    %1581 = vmatpush1.xpose.msra.mxu0 0.0
    %1582 = vmatprep.subr.mxu0 0.0
    %1583 = vmatpush1.xpose.msra.mxu0 0.0
    %1584 = vmatprep.subr.mxu0 0.0
    %1585 = vmatpush1.xpose.msra.mxu0 0.0
    %1586 = vmatprep.subr.mxu0 0.0
    %1587 = vmatpush1.xpose.msra.mxu0 0.0
    %1588 = vmatprep.subr.mxu0 0.0
    %1589 = vmatpush1.xpose.msra.mxu0 0.0
    %1590 = vmatprep.subr.mxu0 0.0
    %1591 = vmatpush1.xpose.msra.mxu0 0.0
    %1592 = vmatprep.subr.mxu0 0.0
    %1593 = vmatpush1.xpose.msra.mxu0 0.0
    %1594 = vmatprep.subr.mxu0 0.0
    %1595 = vmatpush1.xpose.msra.mxu0 0.0
    %1596 = vmatprep.subr.mxu0 0.0
    %1597 = vmatpush1.xpose.msra.mxu0 0.0
    %1598 = vmatprep.subr.mxu0 0.0
    %1599 = vmatpush1.xpose.msra.mxu0 0.0
    %1600 = vmatprep.subr.mxu0 0.0
    %1601 = vmatpush1.xpose.msra.mxu0 0.0
    %1602 = vmatprep.subr.mxu0 0.0
    %1603 = vmatpush1.xpose.msra.mxu0 0.0
    %1604 = vmatprep.subr.mxu0 0.0
    %1605 = vmatpush1.xpose.msra.mxu0 0.0
    %1606 = vmatprep.subr.mxu0 0.0
    %1607 = vmatpush1.xpose.msra.mxu0 0.0
    %1608 = vmatprep.subr.mxu0 0.0
    %1609 = vmatpush1.xpose.msra.mxu0 0.0
    %1610 = vmatprep.subr.mxu0 0.0
    %1611 = vmatpush1.xpose.msra.mxu0 0.0
    %1612 = vmatprep.subr.mxu0 0.0
    %1613 = vmatpush1.xpose.msra.mxu0 0.0
    %1614 = vmatprep.subr.mxu0 0.0
    %1615 = vmatpush1.xpose.msra.mxu0 0.0
    %1616 = vmatprep.subr.mxu0 0.0
    %1617 = vmatpush1.xpose.msra.mxu0 0.0
    %1618 = vmatprep.subr.mxu0 0.0
    %1619 = vmatpush1.xpose.msra.mxu0 0.0
    %1620 = vmatprep.subr.mxu0 0.0
    %1621 = vmatpush1.xpose.msra.mxu0 0.0
    %1622 = vmatprep.subr.mxu0 0.0
    %1623 = vmatpush1.xpose.msra.mxu0 0.0
    %1624 = vmatprep.subr.mxu0 0.0
    %1625 = vmatpush1.xpose.msra.mxu0 0.0
    %1626 = vmatprep.subr.mxu0 0.0
    %1627 = vmatpush1.xpose.msra.mxu0 0.0
    %1628 = vmatprep.subr.mxu0 0.0
    %1629 = vmatpush1.xpose.msra.mxu0 0.0
    %1630 = vmatprep.subr.mxu0 0.0
    %1631 = vmatpush1.xpose.msra.mxu0 0.0
    %1632 = vmatprep.subr.mxu0 0.0
    %1633 = vmatpush1.xpose.msra.mxu0 0.0
    %1634 = vmatprep.subr.mxu0 0.0
    %1635 = vmatpush1.xpose.msra.mxu0 0.0
    %1636 = vmatprep.subr.mxu0 0.0
    %1637 = vmatpush1.xpose.msra.mxu0 0.0
    %1638 = vmatprep.subr.mxu0 0.0
    %1639 = vmatpush1.xpose.msra.mxu0 0.0
    %1640 = vmatprep.mubr.f32.mxu0 0.0
    %1641 = vmatmul.mubr.f32.gmra.mrb[0].mxu0 %v1571
    %v1642 = vpop.f32.mrb[0].mxu0
    %v1643 = vadd.f32 0.0, %v1642
    %v1644 = vpop.f32.mrb[0].mxu0
    %1645 = vdwg.mxu0
    %v1646 = vsel %vm1037, %v1111, -inf
    %1647 = vmax.xlane.f32.xlu0 %v1646
    %v1648 = vpop.xlane.xlu0 %1647
    %v1649 = vsel %vm1037, %v1187, -inf
    %1650 = vmax.xlane.f32.xlu0 %v1649
    %v1651 = vpop.xlane.xlu0 %1650
    %v1652 = vsel %vm1037, %v1263, -inf
    %1653 = vmax.xlane.f32.xlu0 %v1652
    %v1654 = vpop.xlane.xlu0 %1653
    %v1655 = vsel %vm1037, %v1339, -inf
    %1656 = vmax.xlane.f32.xlu0 %v1655
    %v1657 = vpop.xlane.xlu0 %1656
    %v1658 = vsel %vm1037, %v1415, -inf
    %1659 = vmax.xlane.f32.xlu0 %v1658
    %v1660 = vpop.xlane.xlu0 %1659
    %v1661 = vsel %vm1037, %v1491, -inf
    %1662 = vmax.xlane.f32.xlu0 %v1661
    %v1663 = vpop.xlane.xlu0 %1662
    %v1664 = vsel %vm1037, %v1567, -inf
    %1665 = vmax.xlane.f32.xlu0 %v1664
    %v1666 = vpop.xlane.xlu0 %1665
    %v1667 = vsel %vm1037, %v1643, -inf
    %1668 = vmax.xlane.f32.xlu0 %v1667
    %v1669 = vpop.xlane.xlu0 %1668
    %v1670 = vsub.f32 %v1111, %v1648
    %v1671 = vsub.f32 %v1187, %v1651
    %v1672 = vsub.f32 %v1263, %v1654
    %v1673 = vsub.f32 %v1339, %v1657
    %v1674 = vsub.f32 %v1415, %v1660
    %v1675 = vsub.f32 %v1491, %v1663
    %v1676 = vsub.f32 %v1567, %v1666
    %v1677 = vsub.f32 %v1643, %v1669
    %v1678 = vmul.f32 %v1670, 1.442695
    %v1679 = vpow.pop %v1678
    %v1680 = vmul.f32 %v1671, 1.442695
    %v1681 = vpow.pop %v1680
    %v1682 = vmul.f32 %v1672, 1.442695
    %v1683 = vpow.pop %v1682
    %v1684 = vmul.f32 %v1673, 1.442695
    %v1685 = vpow.pop %v1684
    %v1686 = vmul.f32 %v1674, 1.442695
    %v1687 = vpow.pop %v1686
    %v1688 = vmul.f32 %v1675, 1.442695
    %v1689 = vpow.pop %v1688
    %v1690 = vmul.f32 %v1676, 1.442695
    %v1691 = vpow.pop %v1690
    %v1692 = vmul.f32 %v1677, 1.442695
    %v1693 = vpow.pop %v1692
    %v1694 = vsel %vm1037, %v1679, 0.0
    %1695 = vadd.xlane.f32.xlu0 %v1694
    %v1696 = vpop.xlane.xlu0 %1695
    %v1697 = vsel %vm1037, %v1681, 0.0
    %1698 = vadd.xlane.f32.xlu0 %v1697
    %v1699 = vpop.xlane.xlu0 %1698
    %v1700 = vsel %vm1037, %v1683, 0.0
    %1701 = vadd.xlane.f32.xlu0 %v1700
    %v1702 = vpop.xlane.xlu0 %1701
    %v1703 = vsel %vm1037, %v1685, 0.0
    %1704 = vadd.xlane.f32.xlu0 %v1703
    %v1705 = vpop.xlane.xlu0 %1704
    %v1706 = vsel %vm1037, %v1687, 0.0
    %1707 = vadd.xlane.f32.xlu0 %v1706
    %v1708 = vpop.xlane.xlu0 %1707
    %v1709 = vsel %vm1037, %v1689, 0.0
    %1710 = vadd.xlane.f32.xlu0 %v1709
    %v1711 = vpop.xlane.xlu0 %1710
    %v1712 = vsel %vm1037, %v1691, 0.0
    %1713 = vadd.xlane.f32.xlu0 %v1712
    %v1714 = vpop.xlane.xlu0 %1713
    %v1715 = vsel %vm1037, %v1693, 0.0
    %1716 = vadd.xlane.f32.xlu0 %v1715
    %v1717 = vpop.xlane.xlu0 %1716
    %v1718 = vrcp.pop %v1696
    %v1719 = vmul.f32 %v1679, %v1718
    %v1720 = vrcp.pop %v1699
    %v1721 = vmul.f32 %v1681, %v1720
    %v1722 = vrcp.pop %v1702
    %v1723 = vmul.f32 %v1683, %v1722
    %v1724 = vrcp.pop %v1705
    %v1725 = vmul.f32 %v1685, %v1724
    %v1726 = vrcp.pop %v1708
    %v1727 = vmul.f32 %v1687, %v1726
    %v1728 = vrcp.pop %v1711
    %v1729 = vmul.f32 %v1689, %v1728
    %v1730 = vrcp.pop %v1714
    %v1731 = vmul.f32 %v1691, %v1730
    %v1732 = vrcp.pop %v1717
    %v1733 = vmul.f32 %v1693, %v1732
    %1734 = vst.msk [vmem:[#allocation4] sm:$0xff] %vm1037, %v1719
    %1735 = vst.msk [vmem:[#allocation4 + $0x8] sm:$0xff] %vm1037, %v1721
    %1736 = vst.msk [vmem:[#allocation4 + $0x10] sm:$0xff] %vm1037, %v1723
    %1737 = vst.msk [vmem:[#allocation4 + $0x18] sm:$0xff] %vm1037, %v1725
    %1738 = vst.msk [vmem:[#allocation4 + $0x20] sm:$0xff] %vm1037, %v1727
    %1739 = vst.msk [vmem:[#allocation4 + $0x28] sm:$0xff] %vm1037, %v1729
    %1740 = vst.msk [vmem:[#allocation4 + $0x30] sm:$0xff] %vm1037, %v1731
    %1741 = vst.msk [vmem:[#allocation4 + $0x38] sm:$0xff] %vm1037, %v1733
    %v1743 = vsel %vm1037, %v1719, 0
    %1745 = vmatprep.subr.mxu0 0.0
    %1746 = vmatpush1.msra.mxu0 %v965
    %1747 = vmatprep.subr.mxu0 0.0
    %1748 = vmatpush1.msra.mxu0 0.0
    %1749 = vmatprep.subr.mxu0 0.0
    %1750 = vmatpush1.msra.mxu0 0.0
    %1751 = vmatprep.subr.mxu0 0.0
    %1752 = vmatpush1.msra.mxu0 0.0
    %1753 = vmatprep.subr.mxu0 0.0
    %1754 = vmatpush1.msra.mxu0 0.0
    %1755 = vmatprep.subr.mxu0 0.0
    %1756 = vmatpush1.msra.mxu0 0.0
    %1757 = vmatprep.subr.mxu0 0.0
    %1758 = vmatpush1.msra.mxu0 0.0
    %1759 = vmatprep.subr.mxu0 0.0
    %1760 = vmatpush1.msra.mxu0 0.0
    %1761 = vmatprep.subr.mxu0 0.0
    %1762 = vmatpush1.msra.mxu0 0.0
    %1763 = vmatprep.subr.mxu0 0.0
    %1764 = vmatpush1.msra.mxu0 0.0
    %1765 = vmatprep.subr.mxu0 0.0
    %1766 = vmatpush1.msra.mxu0 0.0
    %1767 = vmatprep.subr.mxu0 0.0
    %1768 = vmatpush1.msra.mxu0 0.0
    %1769 = vmatprep.subr.mxu0 0.0
    %1770 = vmatpush1.msra.mxu0 0.0
    %1771 = vmatprep.subr.mxu0 0.0
    %1772 = vmatpush1.msra.mxu0 0.0
    %1773 = vmatprep.subr.mxu0 0.0
    %1774 = vmatpush1.msra.mxu0 0.0
    %1775 = vmatprep.subr.mxu0 0.0
    %1776 = vmatpush1.msra.mxu0 0.0
    %1777 = vmatprep.subr.mxu0 0.0
    %1778 = vmatpush1.msra.mxu0 0.0
    %1779 = vmatprep.subr.mxu0 0.0
    %1780 = vmatpush1.msra.mxu0 0.0
    %1781 = vmatprep.subr.mxu0 0.0
    %1782 = vmatpush1.msra.mxu0 0.0
    %1783 = vmatprep.subr.mxu0 0.0
    %1784 = vmatpush1.msra.mxu0 0.0
    %1785 = vmatprep.subr.mxu0 0.0
    %1786 = vmatpush1.msra.mxu0 0.0
    %1787 = vmatprep.subr.mxu0 0.0
    %1788 = vmatpush1.msra.mxu0 0.0
    %1789 = vmatprep.subr.mxu0 0.0
    %1790 = vmatpush1.msra.mxu0 0.0
    %1791 = vmatprep.subr.mxu0 0.0
    %1792 = vmatpush1.msra.mxu0 0.0
    %1793 = vmatprep.subr.mxu0 0.0
    %1794 = vmatpush1.msra.mxu0 0.0
    %1795 = vmatprep.subr.mxu0 0.0
    %1796 = vmatpush1.msra.mxu0 0.0
    %1797 = vmatprep.subr.mxu0 0.0
    %1798 = vmatpush1.msra.mxu0 0.0
    %1799 = vmatprep.subr.mxu0 0.0
    %1800 = vmatpush1.msra.mxu0 0.0
    %1801 = vmatprep.subr.mxu0 0.0
    %1802 = vmatpush1.msra.mxu0 0.0
    %1803 = vmatprep.subr.mxu0 0.0
    %1804 = vmatpush1.msra.mxu0 0.0
    %1805 = vmatprep.subr.mxu0 0.0
    %1806 = vmatpush1.msra.mxu0 0.0
    %1807 = vmatprep.subr.mxu0 0.0
    %1808 = vmatpush1.msra.mxu0 0.0
    %1809 = vmatprep.mubr.f32.mxu0 0.0
    %1810 = vmatmul.mubr.f32.gmra.mrb[0].mxu0 %v1743
    %v1811 = vpop.f32.mrb[0].mxu0
    %v1812 = vadd.f32 0.0, %v1811
    %v1813 = vpop.f32.mrb[0].mxu0
    %1814 = vdwg.mxu0
    %v1816 = vsel %vm1037, %v1721, 0
    %1818 = vmatprep.subr.mxu0 0.0
    %1819 = vmatpush1.msra.mxu0 %v966
    %1820 = vmatprep.subr.mxu0 0.0
    %1821 = vmatpush1.msra.mxu0 0.0
    %1822 = vmatprep.subr.mxu0 0.0
    %1823 = vmatpush1.msra.mxu0 0.0
    %1824 = vmatprep.subr.mxu0 0.0
    %1825 = vmatpush1.msra.mxu0 0.0
    %1826 = vmatprep.subr.mxu0 0.0
    %1827 = vmatpush1.msra.mxu0 0.0
    %1828 = vmatprep.subr.mxu0 0.0
    %1829 = vmatpush1.msra.mxu0 0.0
    %1830 = vmatprep.subr.mxu0 0.0
    %1831 = vmatpush1.msra.mxu0 0.0
    %1832 = vmatprep.subr.mxu0 0.0
    %1833 = vmatpush1.msra.mxu0 0.0
    %1834 = vmatprep.subr.mxu0 0.0
    %1835 = vmatpush1.msra.mxu0 0.0
    %1836 = vmatprep.subr.mxu0 0.0
    %1837 = vmatpush1.msra.mxu0 0.0
    %1838 = vmatprep.subr.mxu0 0.0
    %1839 = vmatpush1.msra.mxu0 0.0
    %1840 = vmatprep.subr.mxu0 0.0
    %1841 = vmatpush1.msra.mxu0 0.0
    %1842 = vmatprep.subr.mxu0 0.0
    %1843 = vmatpush1.msra.mxu0 0.0
    %1844 = vmatprep.subr.mxu0 0.0
    %1845 = vmatpush1.msra.mxu0 0.0
    %1846 = vmatprep.subr.mxu0 0.0
    %1847 = vmatpush1.msra.mxu0 0.0
    %1848 = vmatprep.subr.mxu0 0.0
    %1849 = vmatpush1.msra.mxu0 0.0
    %1850 = vmatprep.subr.mxu0 0.0
    %1851 = vmatpush1.msra.mxu0 0.0
    %1852 = vmatprep.subr.mxu0 0.0
    %1853 = vmatpush1.msra.mxu0 0.0
    %1854 = vmatprep.subr.mxu0 0.0
    %1855 = vmatpush1.msra.mxu0 0.0
    %1856 = vmatprep.subr.mxu0 0.0
    %1857 = vmatpush1.msra.mxu0 0.0
    %1858 = vmatprep.subr.mxu0 0.0
    %1859 = vmatpush1.msra.mxu0 0.0
    %1860 = vmatprep.subr.mxu0 0.0
    %1861 = vmatpush1.msra.mxu0 0.0
    %1862 = vmatprep.subr.mxu0 0.0
    %1863 = vmatpush1.msra.mxu0 0.0
    %1864 = vmatprep.subr.mxu0 0.0
    %1865 = vmatpush1.msra.mxu0 0.0
    %1866 = vmatprep.subr.mxu0 0.0
    %1867 = vmatpush1.msra.mxu0 0.0
    %1868 = vmatprep.subr.mxu0 0.0
    %1869 = vmatpush1.msra.mxu0 0.0
    %1870 = vmatprep.subr.mxu0 0.0
    %1871 = vmatpush1.msra.mxu0 0.0
    %1872 = vmatprep.subr.mxu0 0.0
    %1873 = vmatpush1.msra.mxu0 0.0
    %1874 = vmatprep.subr.mxu0 0.0
    %1875 = vmatpush1.msra.mxu0 0.0
    %1876 = vmatprep.subr.mxu0 0.0
    %1877 = vmatpush1.msra.mxu0 0.0
    %1878 = vmatprep.subr.mxu0 0.0
    %1879 = vmatpush1.msra.mxu0 0.0
    %1880 = vmatprep.subr.mxu0 0.0
    %1881 = vmatpush1.msra.mxu0 0.0
    %1882 = vmatprep.mubr.f32.mxu0 0.0
    %1883 = vmatmul.mubr.f32.gmra.mrb[0].mxu0 %v1816
    %v1884 = vpop.f32.mrb[0].mxu0
    %v1885 = vadd.f32 0.0, %v1884
    %v1886 = vpop.f32.mrb[0].mxu0
    %1887 = vdwg.mxu0
    %v1889 = vsel %vm1037, %v1723, 0
    %1891 = vmatprep.subr.mxu0 0.0
    %1892 = vmatpush1.msra.mxu0 %v967
    %1893 = vmatprep.subr.mxu0 0.0
    %1894 = vmatpush1.msra.mxu0 0.0
    %1895 = vmatprep.subr.mxu0 0.0
    %1896 = vmatpush1.msra.mxu0 0.0
    %1897 = vmatprep.subr.mxu0 0.0
    %1898 = vmatpush1.msra.mxu0 0.0
    %1899 = vmatprep.subr.mxu0 0.0
    %1900 = vmatpush1.msra.mxu0 0.0
    %1901 = vmatprep.subr.mxu0 0.0
    %1902 = vmatpush1.msra.mxu0 0.0
    %1903 = vmatprep.subr.mxu0 0.0
    %1904 = vmatpush1.msra.mxu0 0.0
    %1905 = vmatprep.subr.mxu0 0.0
    %1906 = vmatpush1.msra.mxu0 0.0
    %1907 = vmatprep.subr.mxu0 0.0
    %1908 = vmatpush1.msra.mxu0 0.0
    %1909 = vmatprep.subr.mxu0 0.0
    %1910 = vmatpush1.msra.mxu0 0.0
    %1911 = vmatprep.subr.mxu0 0.0
    %1912 = vmatpush1.msra.mxu0 0.0
    %1913 = vmatprep.subr.mxu0 0.0
    %1914 = vmatpush1.msra.mxu0 0.0
    %1915 = vmatprep.subr.mxu0 0.0
    %1916 = vmatpush1.msra.mxu0 0.0
    %1917 = vmatprep.subr.mxu0 0.0
    %1918 = vmatpush1.msra.mxu0 0.0
    %1919 = vmatprep.subr.mxu0 0.0
    %1920 = vmatpush1.msra.mxu0 0.0
    %1921 = vmatprep.subr.mxu0 0.0
    %1922 = vmatpush1.msra.mxu0 0.0
    %1923 = vmatprep.subr.mxu0 0.0
    %1924 = vmatpush1.msra.mxu0 0.0
    %1925 = vmatprep.subr.mxu0 0.0
    %1926 = vmatpush1.msra.mxu0 0.0
    %1927 = vmatprep.subr.mxu0 0.0
    %1928 = vmatpush1.msra.mxu0 0.0
    %1929 = vmatprep.subr.mxu0 0.0
    %1930 = vmatpush1.msra.mxu0 0.0
    %1931 = vmatprep.subr.mxu0 0.0
    %1932 = vmatpush1.msra.mxu0 0.0
    %1933 = vmatprep.subr.mxu0 0.0
    %1934 = vmatpush1.msra.mxu0 0.0
    %1935 = vmatprep.subr.mxu0 0.0
    %1936 = vmatpush1.msra.mxu0 0.0
    %1937 = vmatprep.subr.mxu0 0.0
    %1938 = vmatpush1.msra.mxu0 0.0
    %1939 = vmatprep.subr.mxu0 0.0
    %1940 = vmatpush1.msra.mxu0 0.0
    %1941 = vmatprep.subr.mxu0 0.0
    %1942 = vmatpush1.msra.mxu0 0.0
    %1943 = vmatprep.subr.mxu0 0.0
    %1944 = vmatpush1.msra.mxu0 0.0
    %1945 = vmatprep.subr.mxu0 0.0
    %1946 = vmatpush1.msra.mxu0 0.0
    %1947 = vmatprep.subr.mxu0 0.0
    %1948 = vmatpush1.msra.mxu0 0.0
    %1949 = vmatprep.subr.mxu0 0.0
    %1950 = vmatpush1.msra.mxu0 0.0
    %1951 = vmatprep.subr.mxu0 0.0
    %1952 = vmatpush1.msra.mxu0 0.0
    %1953 = vmatprep.subr.mxu0 0.0
    %1954 = vmatpush1.msra.mxu0 0.0
    %1955 = vmatprep.mubr.f32.mxu0 0.0
    %1956 = vmatmul.mubr.f32.gmra.mrb[0].mxu0 %v1889
    %v1957 = vpop.f32.mrb[0].mxu0
    %v1958 = vadd.f32 0.0, %v1957
    %v1959 = vpop.f32.mrb[0].mxu0
    %1960 = vdwg.mxu0
    %v1962 = vsel %vm1037, %v1725, 0
    %1964 = vmatprep.subr.mxu0 0.0
    %1965 = vmatpush1.msra.mxu0 %v968
    %1966 = vmatprep.subr.mxu0 0.0
    %1967 = vmatpush1.msra.mxu0 0.0
    %1968 = vmatprep.subr.mxu0 0.0
    %1969 = vmatpush1.msra.mxu0 0.0
    %1970 = vmatprep.subr.mxu0 0.0
    %1971 = vmatpush1.msra.mxu0 0.0
    %1972 = vmatprep.subr.mxu0 0.0
    %1973 = vmatpush1.msra.mxu0 0.0
    %1974 = vmatprep.subr.mxu0 0.0
    %1975 = vmatpush1.msra.mxu0 0.0
    %1976 = vmatprep.subr.mxu0 0.0
    %1977 = vmatpush1.msra.mxu0 0.0
    %1978 = vmatprep.subr.mxu0 0.0
    %1979 = vmatpush1.msra.mxu0 0.0
    %1980 = vmatprep.subr.mxu0 0.0
    %1981 = vmatpush1.msra.mxu0 0.0
    %1982 = vmatprep.subr.mxu0 0.0
    %1983 = vmatpush1.msra.mxu0 0.0
    %1984 = vmatprep.subr.mxu0 0.0
    %1985 = vmatpush1.msra.mxu0 0.0
    %1986 = vmatprep.subr.mxu0 0.0
    %1987 = vmatpush1.msra.mxu0 0.0
    %1988 = vmatprep.subr.mxu0 0.0
    %1989 = vmatpush1.msra.mxu0 0.0
    %1990 = vmatprep.subr.mxu0 0.0
    %1991 = vmatpush1.msra.mxu0 0.0
    %1992 = vmatprep.subr.mxu0 0.0
    %1993 = vmatpush1.msra.mxu0 0.0
    %1994 = vmatprep.subr.mxu0 0.0
    %1995 = vmatpush1.msra.mxu0 0.0
    %1996 = vmatprep.subr.mxu0 0.0
    %1997 = vmatpush1.msra.mxu0 0.0
    %1998 = vmatprep.subr.mxu0 0.0
    %1999 = vmatpush1.msra.mxu0 0.0
    %2000 = vmatprep.subr.mxu0 0.0
    %2001 = vmatpush1.msra.mxu0 0.0
    %2002 = vmatprep.subr.mxu0 0.0
    %2003 = vmatpush1.msra.mxu0 0.0
    %2004 = vmatprep.subr.mxu0 0.0
    %2005 = vmatpush1.msra.mxu0 0.0
    %2006 = vmatprep.subr.mxu0 0.0
    %2007 = vmatpush1.msra.mxu0 0.0
    %2008 = vmatprep.subr.mxu0 0.0
    %2009 = vmatpush1.msra.mxu0 0.0
    %2010 = vmatprep.subr.mxu0 0.0
    %2011 = vmatpush1.msra.mxu0 0.0
    %2012 = vmatprep.subr.mxu0 0.0
    %2013 = vmatpush1.msra.mxu0 0.0
    %2014 = vmatprep.subr.mxu0 0.0
    %2015 = vmatpush1.msra.mxu0 0.0
    %2016 = vmatprep.subr.mxu0 0.0
    %2017 = vmatpush1.msra.mxu0 0.0
    %2018 = vmatprep.subr.mxu0 0.0
    %2019 = vmatpush1.msra.mxu0 0.0
    %2020 = vmatprep.subr.mxu0 0.0
    %2021 = vmatpush1.msra.mxu0 0.0
    %2022 = vmatprep.subr.mxu0 0.0
    %2023 = vmatpush1.msra.mxu0 0.0
    %2024 = vmatprep.subr.mxu0 0.0
    %2025 = vmatpush1.msra.mxu0 0.0
    %2026 = vmatprep.subr.mxu0 0.0
    %2027 = vmatpush1.msra.mxu0 0.0
    %2028 = vmatprep.mubr.f32.mxu0 0.0
    %2029 = vmatmul.mubr.f32.gmra.mrb[0].mxu0 %v1962
    %v2030 = vpop.f32.mrb[0].mxu0
    %v2031 = vadd.f32 0.0, %v2030
    %v2032 = vpop.f32.mrb[0].mxu0
    %2033 = vdwg.mxu0
    %v2035 = vsel %vm1037, %v1727, 0
    %2037 = vmatprep.subr.mxu0 0.0
    %2038 = vmatpush1.msra.mxu0 %v1033
    %2039 = vmatprep.subr.mxu0 0.0
    %2040 = vmatpush1.msra.mxu0 0.0
    %2041 = vmatprep.subr.mxu0 0.0
    %2042 = vmatpush1.msra.mxu0 0.0
    %2043 = vmatprep.subr.mxu0 0.0
    %2044 = vmatpush1.msra.mxu0 0.0
    %2045 = vmatprep.subr.mxu0 0.0
    %2046 = vmatpush1.msra.mxu0 0.0
    %2047 = vmatprep.subr.mxu0 0.0
    %2048 = vmatpush1.msra.mxu0 0.0
    %2049 = vmatprep.subr.mxu0 0.0
    %2050 = vmatpush1.msra.mxu0 0.0
    %2051 = vmatprep.subr.mxu0 0.0
    %2052 = vmatpush1.msra.mxu0 0.0
    %2053 = vmatprep.subr.mxu0 0.0
    %2054 = vmatpush1.msra.mxu0 0.0
    %2055 = vmatprep.subr.mxu0 0.0
    %2056 = vmatpush1.msra.mxu0 0.0
    %2057 = vmatprep.subr.mxu0 0.0
    %2058 = vmatpush1.msra.mxu0 0.0
    %2059 = vmatprep.subr.mxu0 0.0
    %2060 = vmatpush1.msra.mxu0 0.0
    %2061 = vmatprep.subr.mxu0 0.0
    %2062 = vmatpush1.msra.mxu0 0.0
    %2063 = vmatprep.subr.mxu0 0.0
    %2064 = vmatpush1.msra.mxu0 0.0
    %2065 = vmatprep.subr.mxu0 0.0
    %2066 = vmatpush1.msra.mxu0 0.0
    %2067 = vmatprep.subr.mxu0 0.0
    %2068 = vmatpush1.msra.mxu0 0.0
    %2069 = vmatprep.subr.mxu0 0.0
    %2070 = vmatpush1.msra.mxu0 0.0
    %2071 = vmatprep.subr.mxu0 0.0
    %2072 = vmatpush1.msra.mxu0 0.0
    %2073 = vmatprep.subr.mxu0 0.0
    %2074 = vmatpush1.msra.mxu0 0.0
    %2075 = vmatprep.subr.mxu0 0.0
    %2076 = vmatpush1.msra.mxu0 0.0
    %2077 = vmatprep.subr.mxu0 0.0
    %2078 = vmatpush1.msra.mxu0 0.0
    %2079 = vmatprep.subr.mxu0 0.0
    %2080 = vmatpush1.msra.mxu0 0.0
    %2081 = vmatprep.subr.mxu0 0.0
    %2082 = vmatpush1.msra.mxu0 0.0
    %2083 = vmatprep.subr.mxu0 0.0
    %2084 = vmatpush1.msra.mxu0 0.0
    %2085 = vmatprep.subr.mxu0 0.0
    %2086 = vmatpush1.msra.mxu0 0.0
    %2087 = vmatprep.subr.mxu0 0.0
    %2088 = vmatpush1.msra.mxu0 0.0
    %2089 = vmatprep.subr.mxu0 0.0
    %2090 = vmatpush1.msra.mxu0 0.0
    %2091 = vmatprep.subr.mxu0 0.0
    %2092 = vmatpush1.msra.mxu0 0.0
    %2093 = vmatprep.subr.mxu0 0.0
    %2094 = vmatpush1.msra.mxu0 0.0
    %2095 = vmatprep.subr.mxu0 0.0
    %2096 = vmatpush1.msra.mxu0 0.0
    %2097 = vmatprep.subr.mxu0 0.0
    %2098 = vmatpush1.msra.mxu0 0.0
    %2099 = vmatprep.subr.mxu0 0.0
    %2100 = vmatpush1.msra.mxu0 0.0
    %2101 = vmatprep.mubr.f32.mxu0 0.0
    %2102 = vmatmul.mubr.f32.gmra.mrb[0].mxu0 %v2035
    %v2103 = vpop.f32.mrb[0].mxu0
    %v2104 = vadd.f32 0.0, %v2103
    %v2105 = vpop.f32.mrb[0].mxu0
    %2106 = vdwg.mxu0
    %v2108 = vsel %vm1037, %v1729, 0
    %2110 = vmatprep.subr.mxu0 0.0
    %2111 = vmatpush1.msra.mxu0 %v1034
    %2112 = vmatprep.subr.mxu0 0.0
    %2113 = vmatpush1.msra.mxu0 0.0
    %2114 = vmatprep.subr.mxu0 0.0
    %2115 = vmatpush1.msra.mxu0 0.0
    %2116 = vmatprep.subr.mxu0 0.0
    %2117 = vmatpush1.msra.mxu0 0.0
    %2118 = vmatprep.subr.mxu0 0.0
    %2119 = vmatpush1.msra.mxu0 0.0
    %2120 = vmatprep.subr.mxu0 0.0
    %2121 = vmatpush1.msra.mxu0 0.0
    %2122 = vmatprep.subr.mxu0 0.0
    %2123 = vmatpush1.msra.mxu0 0.0
    %2124 = vmatprep.subr.mxu0 0.0
    %2125 = vmatpush1.msra.mxu0 0.0
    %2126 = vmatprep.subr.mxu0 0.0
    %2127 = vmatpush1.msra.mxu0 0.0
    %2128 = vmatprep.subr.mxu0 0.0
    %2129 = vmatpush1.msra.mxu0 0.0
    %2130 = vmatprep.subr.mxu0 0.0
    %2131 = vmatpush1.msra.mxu0 0.0
    %2132 = vmatprep.subr.mxu0 0.0
    %2133 = vmatpush1.msra.mxu0 0.0
    %2134 = vmatprep.subr.mxu0 0.0
    %2135 = vmatpush1.msra.mxu0 0.0
    %2136 = vmatprep.subr.mxu0 0.0
    %2137 = vmatpush1.msra.mxu0 0.0
    %2138 = vmatprep.subr.mxu0 0.0
    %2139 = vmatpush1.msra.mxu0 0.0
    %2140 = vmatprep.subr.mxu0 0.0
    %2141 = vmatpush1.msra.mxu0 0.0
    %2142 = vmatprep.subr.mxu0 0.0
    %2143 = vmatpush1.msra.mxu0 0.0
    %2144 = vmatprep.subr.mxu0 0.0
    %2145 = vmatpush1.msra.mxu0 0.0
    %2146 = vmatprep.subr.mxu0 0.0
    %2147 = vmatpush1.msra.mxu0 0.0
    %2148 = vmatprep.subr.mxu0 0.0
    %2149 = vmatpush1.msra.mxu0 0.0
    %2150 = vmatprep.subr.mxu0 0.0
    %2151 = vmatpush1.msra.mxu0 0.0
    %2152 = vmatprep.subr.mxu0 0.0
    %2153 = vmatpush1.msra.mxu0 0.0
    %2154 = vmatprep.subr.mxu0 0.0
    %2155 = vmatpush1.msra.mxu0 0.0
    %2156 = vmatprep.subr.mxu0 0.0
    %2157 = vmatpush1.msra.mxu0 0.0
    %2158 = vmatprep.subr.mxu0 0.0
    %2159 = vmatpush1.msra.mxu0 0.0
    %2160 = vmatprep.subr.mxu0 0.0
    %2161 = vmatpush1.msra.mxu0 0.0
    %2162 = vmatprep.subr.mxu0 0.0
    %2163 = vmatpush1.msra.mxu0 0.0
    %2164 = vmatprep.subr.mxu0 0.0
    %2165 = vmatpush1.msra.mxu0 0.0
    %2166 = vmatprep.subr.mxu0 0.0
    %2167 = vmatpush1.msra.mxu0 0.0
    %2168 = vmatprep.subr.mxu0 0.0
    %2169 = vmatpush1.msra.mxu0 0.0
    %2170 = vmatprep.subr.mxu0 0.0
    %2171 = vmatpush1.msra.mxu0 0.0
    %2172 = vmatprep.subr.mxu0 0.0
    %2173 = vmatpush1.msra.mxu0 0.0
    %2174 = vmatprep.mubr.f32.mxu0 0.0
    %2175 = vmatmul.mubr.f32.gmra.mrb[0].mxu0 %v2108
    %v2176 = vpop.f32.mrb[0].mxu0
    %v2177 = vadd.f32 0.0, %v2176
    %v2178 = vpop.f32.mrb[0].mxu0
    %2179 = vdwg.mxu0
    %v2181 = vsel %vm1037, %v1731, 0
    %2183 = vmatprep.subr.mxu0 0.0
    %2184 = vmatpush1.msra.mxu0 %v1035
    %2185 = vmatprep.subr.mxu0 0.0
    %2186 = vmatpush1.msra.mxu0 0.0
    %2187 = vmatprep.subr.mxu0 0.0
    %2188 = vmatpush1.msra.mxu0 0.0
    %2189 = vmatprep.subr.mxu0 0.0
    %2190 = vmatpush1.msra.mxu0 0.0
    %2191 = vmatprep.subr.mxu0 0.0
    %2192 = vmatpush1.msra.mxu0 0.0
    %2193 = vmatprep.subr.mxu0 0.0
    %2194 = vmatpush1.msra.mxu0 0.0
    %2195 = vmatprep.subr.mxu0 0.0
    %2196 = vmatpush1.msra.mxu0 0.0
    %2197 = vmatprep.subr.mxu0 0.0
    %2198 = vmatpush1.msra.mxu0 0.0
    %2199 = vmatprep.subr.mxu0 0.0
    %2200 = vmatpush1.msra.mxu0 0.0
    %2201 = vmatprep.subr.mxu0 0.0
    %2202 = vmatpush1.msra.mxu0 0.0
    %2203 = vmatprep.subr.mxu0 0.0
    %2204 = vmatpush1.msra.mxu0 0.0
    %2205 = vmatprep.subr.mxu0 0.0
    %2206 = vmatpush1.msra.mxu0 0.0
    %2207 = vmatprep.subr.mxu0 0.0
    %2208 = vmatpush1.msra.mxu0 0.0
    %2209 = vmatprep.subr.mxu0 0.0
    %2210 = vmatpush1.msra.mxu0 0.0
    %2211 = vmatprep.subr.mxu0 0.0
    %2212 = vmatpush1.msra.mxu0 0.0
    %2213 = vmatprep.subr.mxu0 0.0
    %2214 = vmatpush1.msra.mxu0 0.0
    %2215 = vmatprep.subr.mxu0 0.0
    %2216 = vmatpush1.msra.mxu0 0.0
    %2217 = vmatprep.subr.mxu0 0.0
    %2218 = vmatpush1.msra.mxu0 0.0
    %2219 = vmatprep.subr.mxu0 0.0
    %2220 = vmatpush1.msra.mxu0 0.0
    %2221 = vmatprep.subr.mxu0 0.0
    %2222 = vmatpush1.msra.mxu0 0.0
    %2223 = vmatprep.subr.mxu0 0.0
    %2224 = vmatpush1.msra.mxu0 0.0
    %2225 = vmatprep.subr.mxu0 0.0
    %2226 = vmatpush1.msra.mxu0 0.0
    %2227 = vmatprep.subr.mxu0 0.0
    %2228 = vmatpush1.msra.mxu0 0.0
    %2229 = vmatprep.subr.mxu0 0.0
    %2230 = vmatpush1.msra.mxu0 0.0
    %2231 = vmatprep.subr.mxu0 0.0
    %2232 = vmatpush1.msra.mxu0 0.0
    %2233 = vmatprep.subr.mxu0 0.0
    %2234 = vmatpush1.msra.mxu0 0.0
    %2235 = vmatprep.subr.mxu0 0.0
    %2236 = vmatpush1.msra.mxu0 0.0
    %2237 = vmatprep.subr.mxu0 0.0
    %2238 = vmatpush1.msra.mxu0 0.0
    %2239 = vmatprep.subr.mxu0 0.0
    %2240 = vmatpush1.msra.mxu0 0.0
    %2241 = vmatprep.subr.mxu0 0.0
    %2242 = vmatpush1.msra.mxu0 0.0
    %2243 = vmatprep.subr.mxu0 0.0
    %2244 = vmatpush1.msra.mxu0 0.0
    %2245 = vmatprep.subr.mxu0 0.0
    %2246 = vmatpush1.msra.mxu0 0.0
    %2247 = vmatprep.mubr.f32.mxu0 0.0
    %2248 = vmatmul.mubr.f32.gmra.mrb[0].mxu0 %v2181
    %v2249 = vpop.f32.mrb[0].mxu0
    %v2250 = vadd.f32 0.0, %v2249
    %v2251 = vpop.f32.mrb[0].mxu0
    %2252 = vdwg.mxu0
    %v2254 = vsel %vm1037, %v1733, 0
    %2256 = vmatprep.subr.mxu0 0.0
    %2257 = vmatpush1.msra.mxu0 %v1036
    %2258 = vmatprep.subr.mxu0 0.0
    %2259 = vmatpush1.msra.mxu0 0.0
    %2260 = vmatprep.subr.mxu0 0.0
    %2261 = vmatpush1.msra.mxu0 0.0
    %2262 = vmatprep.subr.mxu0 0.0
    %2263 = vmatpush1.msra.mxu0 0.0
    %2264 = vmatprep.subr.mxu0 0.0
    %2265 = vmatpush1.msra.mxu0 0.0
    %2266 = vmatprep.subr.mxu0 0.0
    %2267 = vmatpush1.msra.mxu0 0.0
    %2268 = vmatprep.subr.mxu0 0.0
    %2269 = vmatpush1.msra.mxu0 0.0
    %2270 = vmatprep.subr.mxu0 0.0
    %2271 = vmatpush1.msra.mxu0 0.0
    %2272 = vmatprep.subr.mxu0 0.0
    %2273 = vmatpush1.msra.mxu0 0.0
    %2274 = vmatprep.subr.mxu0 0.0
    %2275 = vmatpush1.msra.mxu0 0.0
    %2276 = vmatprep.subr.mxu0 0.0
    %2277 = vmatpush1.msra.mxu0 0.0
    %2278 = vmatprep.subr.mxu0 0.0
    %2279 = vmatpush1.msra.mxu0 0.0
    %2280 = vmatprep.subr.mxu0 0.0
    %2281 = vmatpush1.msra.mxu0 0.0
    %2282 = vmatprep.subr.mxu0 0.0
    %2283 = vmatpush1.msra.mxu0 0.0
    %2284 = vmatprep.subr.mxu0 0.0
    %2285 = vmatpush1.msra.mxu0 0.0
    %2286 = vmatprep.subr.mxu0 0.0
    %2287 = vmatpush1.msra.mxu0 0.0
    %2288 = vmatprep.subr.mxu0 0.0
    %2289 = vmatpush1.msra.mxu0 0.0
    %2290 = vmatprep.subr.mxu0 0.0
    %2291 = vmatpush1.msra.mxu0 0.0
    %2292 = vmatprep.subr.mxu0 0.0
    %2293 = vmatpush1.msra.mxu0 0.0
    %2294 = vmatprep.subr.mxu0 0.0
    %2295 = vmatpush1.msra.mxu0 0.0
    %2296 = vmatprep.subr.mxu0 0.0
    %2297 = vmatpush1.msra.mxu0 0.0
    %2298 = vmatprep.subr.mxu0 0.0
    %2299 = vmatpush1.msra.mxu0 0.0
    %2300 = vmatprep.subr.mxu0 0.0
    %2301 = vmatpush1.msra.mxu0 0.0
    %2302 = vmatprep.subr.mxu0 0.0
    %2303 = vmatpush1.msra.mxu0 0.0
    %2304 = vmatprep.subr.mxu0 0.0
    %2305 = vmatpush1.msra.mxu0 0.0
    %2306 = vmatprep.subr.mxu0 0.0
    %2307 = vmatpush1.msra.mxu0 0.0
    %2308 = vmatprep.subr.mxu0 0.0
    %2309 = vmatpush1.msra.mxu0 0.0
    %2310 = vmatprep.subr.mxu0 0.0
    %2311 = vmatpush1.msra.mxu0 0.0
    %2312 = vmatprep.subr.mxu0 0.0
    %2313 = vmatpush1.msra.mxu0 0.0
    %2314 = vmatprep.subr.mxu0 0.0
    %2315 = vmatpush1.msra.mxu0 0.0
    %2316 = vmatprep.subr.mxu0 0.0
    %2317 = vmatpush1.msra.mxu0 0.0
    %2318 = vmatprep.subr.mxu0 0.0
    %2319 = vmatpush1.msra.mxu0 0.0
    %2320 = vmatprep.mubr.f32.mxu0 0.0
    %2321 = vmatmul.mubr.f32.gmra.mrb[0].mxu0 %v2254
    %v2322 = vpop.f32.mrb[0].mxu0
    %v2323 = vadd.f32 0.0, %v2322
    %v2324 = vpop.f32.mrb[0].mxu0
    %2325 = vdwg.mxu0
    %v2326 = vcombine.low %v1812, %v1958
    %v2327 = vcombine.high %v1812, %v1958
    %v2329 = vunpack.c.l.s4 1983009808
    %v2330 = vunpack.c.0.s8 %v2329
    %v2331 = vlaneseq
    %v2332 = vshrl.u32 %v2331, 7
    %v2333 = vsub.s32 %v2330, %v2332
    %v2334 = vrot.slane %v2326, %v2333
    %v2336 = vunpack.c.l.s4 1983009808
    %v2337 = vunpack.c.0.s8 %v2336
    %v2338 = vlaneseq
    %v2339 = vshrl.u32 %v2338, 7
    %v2340 = vsub.s32 %v2337, %v2339
    %v2341 = vrot.slane %v2327, %v2340
    %v2342 = vcombine.low %v1885, %v2031
    %v2343 = vcombine.high %v1885, %v2031
    %v2345 = vunpack.c.l.s4 1983009808
    %v2346 = vunpack.c.0.s8 %v2345
    %v2347 = vlaneseq
    %v2348 = vshrl.u32 %v2347, 7
    %v2349 = vsub.s32 %v2346, %v2348
    %v2350 = vrot.slane %v2342, %v2349
    %v2352 = vunpack.c.l.s4 1983009808
    %v2353 = vunpack.c.0.s8 %v2352
    %v2354 = vlaneseq
    %v2355 = vshrl.u32 %v2354, 7
    %v2356 = vsub.s32 %v2353, %v2355
    %v2357 = vrot.slane %v2343, %v2356
    %v2358 = vcombine.low %v2334, %v2350
    %v2359 = vcombine.high %v2334, %v2350
    %v2361 = vunpack.c.l.s4 1934713408
    %v2362 = vunpack.c.0.s8 %v2361
    %v2363 = vlaneseq
    %v2364 = vshrl.u32 %v2363, 7
    %v2365 = vsub.s32 %v2362, %v2364
    %v2366 = vrot.slane %v2358, %v2365
    %v2368 = vunpack.c.l.s4 1934713408
    %v2369 = vunpack.c.0.s8 %v2368
    %v2370 = vlaneseq
    %v2371 = vshrl.u32 %v2370, 7
    %v2372 = vsub.s32 %v2369, %v2371
    %v2373 = vrot.slane %v2359, %v2372
    %v2374 = vcombine.low %v2341, %v2357
    %v2375 = vcombine.high %v2341, %v2357
    %v2377 = vunpack.c.l.s4 1934713408
    %v2378 = vunpack.c.0.s8 %v2377
    %v2379 = vlaneseq
    %v2380 = vshrl.u32 %v2379, 7
    %v2381 = vsub.s32 %v2378, %v2380
    %v2382 = vrot.slane %v2374, %v2381
    %v2384 = vunpack.c.l.s4 1934713408
    %v2385 = vunpack.c.0.s8 %v2384
    %v2386 = vlaneseq
    %v2387 = vshrl.u32 %v2386, 7
    %v2388 = vsub.s32 %v2385, %v2387
    %v2389 = vrot.slane %v2375, %v2388
    %v2390 = vcombine.high %v2366, 0.0
    %v2391 = vcombine.high %v2373, 0.0
    %v2392 = vcombine.high %v2382, 0.0
    %v2393 = vcombine.high %v2389, 0.0
    %v2394 = vcombine.low %v2104, %v2250
    %v2395 = vcombine.high %v2104, %v2250
    %v2397 = vunpack.c.l.s4 1983009808
    %v2398 = vunpack.c.0.s8 %v2397
    %v2399 = vlaneseq
    %v2400 = vshrl.u32 %v2399, 7
    %v2401 = vsub.s32 %v2398, %v2400
    %v2402 = vrot.slane %v2394, %v2401
    %v2404 = vunpack.c.l.s4 1983009808
    %v2405 = vunpack.c.0.s8 %v2404
    %v2406 = vlaneseq
    %v2407 = vshrl.u32 %v2406, 7
    %v2408 = vsub.s32 %v2405, %v2407
    %v2409 = vrot.slane %v2395, %v2408
    %v2410 = vcombine.low %v2177, %v2323
    %v2411 = vcombine.high %v2177, %v2323
    %v2413 = vunpack.c.l.s4 1983009808
    %v2414 = vunpack.c.0.s8 %v2413
    %v2415 = vlaneseq
    %v2416 = vshrl.u32 %v2415, 7
    %v2417 = vsub.s32 %v2414, %v2416
    %v2418 = vrot.slane %v2410, %v2417
    %v2420 = vunpack.c.l.s4 1983009808
    %v2421 = vunpack.c.0.s8 %v2420
    %v2422 = vlaneseq
    %v2423 = vshrl.u32 %v2422, 7
    %v2424 = vsub.s32 %v2421, %v2423
    %v2425 = vrot.slane %v2411, %v2424
    %v2426 = vcombine.low %v2402, %v2418
    %v2427 = vcombine.high %v2402, %v2418
    %v2429 = vunpack.c.l.s4 1934713408
    %v2430 = vunpack.c.0.s8 %v2429
    %v2431 = vlaneseq
    %v2432 = vshrl.u32 %v2431, 7
    %v2433 = vsub.s32 %v2430, %v2432
    %v2434 = vrot.slane %v2426, %v2433
    %v2436 = vunpack.c.l.s4 1934713408
    %v2437 = vunpack.c.0.s8 %v2436
    %v2438 = vlaneseq
    %v2439 = vshrl.u32 %v2438, 7
    %v2440 = vsub.s32 %v2437, %v2439
    %v2441 = vrot.slane %v2427, %v2440
    %v2442 = vcombine.low %v2409, %v2425
    %v2443 = vcombine.high %v2409, %v2425
    %v2445 = vunpack.c.l.s4 1934713408
    %v2446 = vunpack.c.0.s8 %v2445
    %v2447 = vlaneseq
    %v2448 = vshrl.u32 %v2447, 7
    %v2449 = vsub.s32 %v2446, %v2448
    %v2450 = vrot.slane %v2442, %v2449
    %v2452 = vunpack.c.l.s4 1934713408
    %v2453 = vunpack.c.0.s8 %v2452
    %v2454 = vlaneseq
    %v2455 = vshrl.u32 %v2454, 7
    %v2456 = vsub.s32 %v2453, %v2455
    %v2457 = vrot.slane %v2443, %v2456
    %v2458 = vcombine.high %v2434, 0.0
    %v2459 = vcombine.high %v2441, 0.0
    %v2460 = vcombine.high %v2450, 0.0
    %v2461 = vcombine.high %v2457, 0.0
    %v2462 = vcombine.low %v2366, %v2373
    %v2464 = vunpack.c.l.s4 1983009808
    %v2465 = vunpack.c.0.s8 %v2464
    %v2466 = vlaneseq
    %v2467 = vshrl.u32 %v2466, 7
    %v2468 = vsub.s32 %v2465, %v2467
    %v2469 = vrot.slane %v2462, %v2468
    %v2470 = vcombine.low %v2390, %v2391
    %v2472 = vunpack.c.l.s4 1983009808
    %v2473 = vunpack.c.0.s8 %v2472
    %v2474 = vlaneseq
    %v2475 = vshrl.u32 %v2474, 7
    %v2476 = vsub.s32 %v2473, %v2475
    %v2477 = vrot.slane %v2470, %v2476
    %v2478 = vcombine.low %v2382, %v2389
    %v2480 = vunpack.c.l.s4 1983009808
    %v2481 = vunpack.c.0.s8 %v2480
    %v2482 = vlaneseq
    %v2483 = vshrl.u32 %v2482, 7
    %v2484 = vsub.s32 %v2481, %v2483
    %v2485 = vrot.slane %v2478, %v2484
    %v2486 = vcombine.low %v2392, %v2393
    %v2488 = vunpack.c.l.s4 1983009808
    %v2489 = vunpack.c.0.s8 %v2488
    %v2490 = vlaneseq
    %v2491 = vshrl.u32 %v2490, 7
    %v2492 = vsub.s32 %v2489, %v2491
    %v2493 = vrot.slane %v2486, %v2492
    %v2494 = vcombine.low %v2469, %v2477
    %v2495 = vcombine.high %v2469, %v2477
    %v2497 = vunpack.c.l.s4 1934713408
    %v2498 = vunpack.c.0.s8 %v2497
    %v2499 = vlaneseq
    %v2500 = vshrl.u32 %v2499, 7
    %v2501 = vsub.s32 %v2498, %v2500
    %v2502 = vrot.slane %v2494, %v2501
    %v2504 = vunpack.c.l.s4 1934713408
    %v2505 = vunpack.c.0.s8 %v2504
    %v2506 = vlaneseq
    %v2507 = vshrl.u32 %v2506, 7
    %v2508 = vsub.s32 %v2505, %v2507
    %v2509 = vrot.slane %v2495, %v2508
    %v2510 = vcombine.low %v2485, %v2493
    %v2511 = vcombine.high %v2485, %v2493
    %v2513 = vunpack.c.l.s4 1934713408
    %v2514 = vunpack.c.0.s8 %v2513
    %v2515 = vlaneseq
    %v2516 = vshrl.u32 %v2515, 7
    %v2517 = vsub.s32 %v2514, %v2516
    %v2518 = vrot.slane %v2510, %v2517
    %v2520 = vunpack.c.l.s4 1934713408
    %v2521 = vunpack.c.0.s8 %v2520
    %v2522 = vlaneseq
    %v2523 = vshrl.u32 %v2522, 7
    %v2524 = vsub.s32 %v2521, %v2523
    %v2525 = vrot.slane %v2511, %v2524
    %v2526 = vcombine.low %v2502, %v2518
    %v2527 = vcombine.high %v2502, %v2518
    %v2528 = vcombine.low %v2509, %v2525
    %v2529 = vcombine.high %v2509, %v2525
    %v2530 = vcombine.low %v2434, %v2441
    %v2532 = vunpack.c.l.s4 1983009808
    %v2533 = vunpack.c.0.s8 %v2532
    %v2534 = vlaneseq
    %v2535 = vshrl.u32 %v2534, 7
    %v2536 = vsub.s32 %v2533, %v2535
    %v2537 = vrot.slane %v2530, %v2536
    %v2538 = vcombine.low %v2458, %v2459
    %v2540 = vunpack.c.l.s4 1983009808
    %v2541 = vunpack.c.0.s8 %v2540
    %v2542 = vlaneseq
    %v2543 = vshrl.u32 %v2542, 7
    %v2544 = vsub.s32 %v2541, %v2543
    %v2545 = vrot.slane %v2538, %v2544
    %v2546 = vcombine.low %v2450, %v2457
    %v2548 = vunpack.c.l.s4 1983009808
    %v2549 = vunpack.c.0.s8 %v2548
    %v2550 = vlaneseq
    %v2551 = vshrl.u32 %v2550, 7
    %v2552 = vsub.s32 %v2549, %v2551
    %v2553 = vrot.slane %v2546, %v2552
    %v2554 = vcombine.low %v2460, %v2461
    %v2556 = vunpack.c.l.s4 1983009808
    %v2557 = vunpack.c.0.s8 %v2556
    %v2558 = vlaneseq
    %v2559 = vshrl.u32 %v2558, 7
    %v2560 = vsub.s32 %v2557, %v2559
    %v2561 = vrot.slane %v2554, %v2560
    %v2562 = vcombine.low %v2537, %v2545
    %v2563 = vcombine.high %v2537, %v2545
    %v2565 = vunpack.c.l.s4 1934713408
    %v2566 = vunpack.c.0.s8 %v2565
    %v2567 = vlaneseq
    %v2568 = vshrl.u32 %v2567, 7
    %v2569 = vsub.s32 %v2566, %v2568
    %v2570 = vrot.slane %v2562, %v2569
    %v2572 = vunpack.c.l.s4 1934713408
    %v2573 = vunpack.c.0.s8 %v2572
    %v2574 = vlaneseq
    %v2575 = vshrl.u32 %v2574, 7
    %v2576 = vsub.s32 %v2573, %v2575
    %v2577 = vrot.slane %v2563, %v2576
    %v2578 = vcombine.low %v2553, %v2561
    %v2579 = vcombine.high %v2553, %v2561
    %v2581 = vunpack.c.l.s4 1934713408
    %v2582 = vunpack.c.0.s8 %v2581
    %v2583 = vlaneseq
    %v2584 = vshrl.u32 %v2583, 7
    %v2585 = vsub.s32 %v2582, %v2584
    %v2586 = vrot.slane %v2578, %v2585
    %v2588 = vunpack.c.l.s4 1934713408
    %v2589 = vunpack.c.0.s8 %v2588
    %v2590 = vlaneseq
    %v2591 = vshrl.u32 %v2590, 7
    %v2592 = vsub.s32 %v2589, %v2591
    %v2593 = vrot.slane %v2579, %v2592
    %v2594 = vcombine.low %v2570, %v2586
    %v2595 = vcombine.high %v2570, %v2586
    %v2596 = vcombine.low %v2577, %v2593
    %v2597 = vcombine.high %v2577, %v2593
    %2600 = vrot.lane.b32.xlu0 %v2527, 8
    %v2601 = vpop.permute.xlu0 %2600
    %2602 = vrot.lane.b32.xlu0 %v2595, 8
    %v2603 = vpop.permute.xlu0 %2602
    %2608 = vrot.lane.b32.xlu0 %v2528, 16
    %v2609 = vpop.permute.xlu0 %2608
    %2610 = vrot.lane.b32.xlu0 %v2596, 16
    %v2611 = vpop.permute.xlu0 %2610
    %2616 = vrot.lane.b32.xlu0 %v2529, 24
    %v2617 = vpop.permute.xlu0 %2616
    %2618 = vrot.lane.b32.xlu0 %v2597, 24
    %v2619 = vpop.permute.xlu0 %2618
    %v2622 = vsel %vm1037, %v2526, %v2601
    %v2623 = vsel %vm1037, %v2594, %v2603
    %vm2624 = vcmask 130048
    %v2625 = vsel %vm2624, %v2622, %v2609
    %v2626 = vsel %vm2624, %v2623, %v2611
    %vm2627 = vcmask 195584
    %v2628 = vsel %vm2627, %v2625, %v2617
    %v2629 = vsel %vm2627, %v2626, %v2619
    %v2630 = vld [vmem:[%s2] sm:$0xff]
    %v2631 = vld [vmem:[%s2 + $0x8] sm:$0xff]
    %v2632 = vld [vmem:[%s2 + $0x10] sm:$0xff]
    %v2633 = vld [vmem:[%s2 + $0x18] sm:$0xff]
    %v2634 = vld [vmem:[%s3] sm:$0x1]
    %v2636 = vlaneseq
    %v2637 = vshrl.u32 %v2636, 7
    %v2638 = vsub.s32 0, %v2637
    %v2639 = vrot.slane %v2634, %v2638
    %v2642 = vsel %vm35, %v2628, 0
    %v2645 = vsel %vm35, %v2629, 0
    %v2648 = vsel %vm35, %v2630, 0
    %v2651 = vsel %vm35, %v2631, 0
    %v2654 = vsel %vm35, %v2632, 0
    %v2657 = vsel %vm35, %v2633, 0
    %2659 = vmatprep.subr.mxu0 0.0
    %2660 = vmatpush1.xpose.msra.mxu0 %v2648
    %2661 = vmatprep.subr.mxu0 0.0
    %2662 = vmatpush1.xpose.msra.mxu0 %v2651
    %2663 = vmatprep.subr.mxu0 0.0
    %2664 = vmatpush1.xpose.msra.mxu0 %v2654
    %2665 = vmatprep.subr.mxu0 0.0
    %2666 = vmatpush1.xpose.msra.mxu0 %v2657
    %2667 = vmatprep.subr.mxu0 0.0
    %2668 = vmatpush1.xpose.msra.mxu0 0.0
    %2669 = vmatprep.subr.mxu0 0.0
    %2670 = vmatpush1.xpose.msra.mxu0 0.0
    %2671 = vmatprep.subr.mxu0 0.0
    %2672 = vmatpush1.xpose.msra.mxu0 0.0
    %2673 = vmatprep.subr.mxu0 0.0
    %2674 = vmatpush1.xpose.msra.mxu0 0.0
    %2675 = vmatprep.subr.mxu0 0.0
    %2676 = vmatpush1.xpose.msra.mxu0 0.0
    %2677 = vmatprep.subr.mxu0 0.0
    %2678 = vmatpush1.xpose.msra.mxu0 0.0
    %2679 = vmatprep.subr.mxu0 0.0
    %2680 = vmatpush1.xpose.msra.mxu0 0.0
    %2681 = vmatprep.subr.mxu0 0.0
    %2682 = vmatpush1.xpose.msra.mxu0 0.0
    %2683 = vmatprep.subr.mxu0 0.0
    %2684 = vmatpush1.xpose.msra.mxu0 0.0
    %2685 = vmatprep.subr.mxu0 0.0
    %2686 = vmatpush1.xpose.msra.mxu0 0.0
    %2687 = vmatprep.subr.mxu0 0.0
    %2688 = vmatpush1.xpose.msra.mxu0 0.0
    %2689 = vmatprep.subr.mxu0 0.0
    %2690 = vmatpush1.xpose.msra.mxu0 0.0
    %2691 = vmatprep.subr.mxu0 0.0
    %2692 = vmatpush1.xpose.msra.mxu0 0.0
    %2693 = vmatprep.subr.mxu0 0.0
    %2694 = vmatpush1.xpose.msra.mxu0 0.0
    %2695 = vmatprep.subr.mxu0 0.0
    %2696 = vmatpush1.xpose.msra.mxu0 0.0
    %2697 = vmatprep.subr.mxu0 0.0
    %2698 = vmatpush1.xpose.msra.mxu0 0.0
    %2699 = vmatprep.subr.mxu0 0.0
    %2700 = vmatpush1.xpose.msra.mxu0 0.0
    %2701 = vmatprep.subr.mxu0 0.0
    %2702 = vmatpush1.xpose.msra.mxu0 0.0
    %2703 = vmatprep.subr.mxu0 0.0
    %2704 = vmatpush1.xpose.msra.mxu0 0.0
    %2705 = vmatprep.subr.mxu0 0.0
    %2706 = vmatpush1.xpose.msra.mxu0 0.0
    %2707 = vmatprep.subr.mxu0 0.0
    %2708 = vmatpush1.xpose.msra.mxu0 0.0
    %2709 = vmatprep.subr.mxu0 0.0
    %2710 = vmatpush1.xpose.msra.mxu0 0.0
    %2711 = vmatprep.subr.mxu0 0.0
    %2712 = vmatpush1.xpose.msra.mxu0 0.0
    %2713 = vmatprep.subr.mxu0 0.0
    %2714 = vmatpush1.xpose.msra.mxu0 0.0
    %2715 = vmatprep.subr.mxu0 0.0
    %2716 = vmatpush1.xpose.msra.mxu0 0.0
    %2717 = vmatprep.subr.mxu0 0.0
    %2718 = vmatpush1.xpose.msra.mxu0 0.0
    %2719 = vmatprep.subr.mxu0 0.0
    %2720 = vmatpush1.xpose.msra.mxu0 0.0
    %2721 = vmatprep.subr.mxu0 0.0
    %2722 = vmatpush1.xpose.msra.mxu0 0.0
    %2723 = vmatprep.mubr.f32.mxu0 0.0
    %2724 = vmatmul.mubr.f32.gmra.mrb[0].mxu0 %v2642
    %v2725 = vpop.f32.mrb[0].mxu0
    %v2726 = vadd.f32 %v2639, %v2725
    %v2727 = vpop.f32.mrb[0].mxu0
    %2728 = vmatprep.mubr.f32.mxu0 0.0
    %2729 = vmatmul.mubr.f32.gmra.mrb[0].mxu0 %v2645
    %v2730 = vpop.f32.mrb[0].mxu0
    %v2731 = vadd.f32 %v2639, %v2730
    %v2732 = vpop.f32.mrb[0].mxu0
    %2733 = vdwg.mxu0
    %2734 = vst.msk [vmem:[#allocation2] sm:$0xff] %vm35, %v2726
    %2735 = vst.msk [vmem:[#allocation2 + $0x8] sm:$0xff] %vm35, %v2731
    // Predicated region
    $region18: #{tpu_custom_call.1} parent=1 // pred_check
      _
    $region19: #{tpu_custom_call.1} parent=1 // pred_check_branch
      %2737 = sbr.rel (0) target = $region21
    $region20: #{tpu_custom_call.1} parent=1 // pred_region
      %s2739 = ssub.s32 256, 256
      %2740 = vsyncadd [#allocation3], %s2739
      %s2741 = sshll.u32 [#allocation2], 4
      %s2742 = int_to_ptr.vmem [resolvable:$true] %s2741
      %2747 = dma.vmem_to_hbm [thread:$0]  %s2742, 256, %s4, [#allocation3], 128, 128, 8
    $region21: #{tpu_custom_call.1} parent=1 // pred_fallthru
      _
    // Predicated region
    $region22: #{tpu_custom_call.1} parent=1 // pred_check
      _
    $region23: #{tpu_custom_call.1} parent=1 // pred_check_branch
      %2749 = sbr.rel (0) target = $region25
    $region24: #{tpu_custom_call.1} parent=1 // pred_region
      %s2751 = ssub.s32 1024, 1024
      %2752 = vsyncadd [#allocation5], %s2751
      %s2753 = sshll.u32 [#allocation4], 4
      %s2754 = int_to_ptr.vmem [resolvable:$true] %s2753
      %2759 = dma.vmem_to_hbm [thread:$0]  %s2754, 1024, %s5, [#allocation5], 128, 128, 8
    $region25: #{tpu_custom_call.1} parent=1 // pred_fallthru
      _
    // Predicated region
    $region26: #{tpu_custom_call.1} parent=1 // pred_check
      _
    $region27: #{tpu_custom_call.1} parent=1 // pred_check_branch
      %2761 = sbr.rel (0) target = $region29
    $region28: #{tpu_custom_call.1} parent=1 // pred_region
      %2762 = dma.done [#allocation3], 256
    $region29: #{tpu_custom_call.1} parent=1 // pred_fallthru
      _
    // Predicated region
    $region30: #{tpu_custom_call.1} parent=1 // pred_check
      _
    $region31: #{tpu_custom_call.1} parent=1 // pred_check_branch
      %2764 = sbr.rel (0) target = $region33
    $region32: #{tpu_custom_call.1} parent=1 // pred_region
      %2765 = dma.done [#allocation5], 1024
    $region33: #{tpu_custom_call.1} parent=1 // pred_fallthru
      _
    %2766 = vsyncpa [#allocation3], 1
    %2767 = vsyncpa [#allocation5], 1

</llo_original>
